<compile_context>
chip_gen: v7x
topology: tpu7x:2x2x1
jax: 0.10.0
libtpu: 0.0.40
codegen_flags: <defaults>
</compile_context>

<pallas_src>
import functools

import jax
import jax.numpy as jnp
from jax.experimental import pallas as pl
from jax.experimental.pallas import tpu as pltpu


# ---------------------------------------------------------------------------
# Static layout plan for the packed weight / bias buffers.
# ---------------------------------------------------------------------------
def _build_plan(C, levels):
    raw = []
    c = C
    for _ in range(levels):
        raw.append(c)
        c //= 2
    padded = [max(8, ((c + 7) // 8) * 8) for c in raw]   # >= one f32 sublane tile
    kmax = 9 * padded[0]
    lvls, w_off, b_off = [], 0, 0
    for i in range(levels):
        ci = padded[i]
        cn = padded[i + 1] if i + 1 < levels else 0
        e = dict(C=ci, Cnext=cn, w1=w_off, w1_rows=ci + cn, b1=b_off)
        w_off += ci + cn                       # fused conv1 (+ proj_down rows)
        e["w2"] = w_off
        w_off += ci
        e["b2"] = b_off + ci
        b_off += 2 * ci
        lvls.append(e)
    pus = []
    for i in range(levels - 1):
        pus.append(dict(off=w_off, M=padded[i], K=padded[i + 1]))
        w_off += padded[i]
    return dict(raw=raw, padded=padded, kmax=kmax, levels=lvls,
                proj_up=pus, w_rows=w_off, b_rows=b_off)


# ---------------------------------------------------------------------------
# Fused kernel: whole FractalResidualBlock forward for one image per grid step.
# Activation layout inside the kernel: (C, H*W), lane-dense (H*W = 256).
# ---------------------------------------------------------------------------
def _make_block_kernel(plan, H, W):
    HW = H * W
    # tap order matches the weight layout: col = (ky*3+kx)*Cin + ci
    shifts = [(ky - 1) * W + (kx - 1) for ky in range(3) for kx in range(3)]
    lvls = plan["levels"]
    pus = plan["proj_up"]
    nlev = len(lvls)

    def kernel(x_ref, mask_ref, w_ref, b_ref, out_ref, tap_ref):
        masks = mask_ref[...]                                    # (9, HW) bf16
        # Hoisted broadcasted mask rows per channel width (no per-conv rebroadcast).
        widths = sorted({e["C"] for e in lvls})
        mb = {c: [jnp.broadcast_to(masks[k:k + 1, :], (c, HW)) for k in range(9)]
              for c in widths}

        def silu(v):                                             # EUP exp + EUP recip
            return v * pl.reciprocal(1.0 + jnp.exp(-v), approx=True)

        def build_taps(v, cin):
            # v: (cin, HW) f32. Writes 9 masked shifted taps as bf16 rows
            # [k*cin, (k+1)*cin) of the persistent tap scratch (no concat).
            m = mb[cin]
            for k, s in enumerate(shifts):
                if s == 0:                                       # center tap: mask == 1
                    tap_ref[k * cin:(k + 1) * cin, :] = v.astype(jnp.bfloat16)
                else:
                    t = pltpu.roll(v, (-s) % HW, axis=1)         # XLU lane rotate
                    tap_ref[k * cin:(k + 1) * cin, :] = (
                        t.astype(jnp.bfloat16) * m[k])           # bf16 VALU mask

        def gemm_taps(woff, m_rows, kin):
            return jnp.dot(w_ref[woff:woff + m_rows, 0:kin], tap_ref[0:kin, :],
                           preferred_element_type=jnp.float32)

        def mat1x1(woff, m_rows, kin, v):
            return jnp.dot(w_ref[woff:woff + m_rows, 0:kin], v.astype(jnp.bfloat16),
                           preferred_element_type=jnp.float32)

        def block(v, i):
            e = lvls[i]
            c, cn = e["C"], e["Cnext"]
            # conv1+BN fused with proj_down (extra output rows on the center tap)
            build_taps(v, c)
            f = gemm_taps(e["w1"], e["w1_rows"], 9 * c)
            y = silu(f[0:c, :] + b_ref[e["b1"]:e["b1"] + c, :])
            # conv2+BN, residual add, SiLU
            build_taps(y, c)
            out = silu(gemm_taps(e["w2"], c, 9 * c)
                       + b_ref[e["b2"]:e["b2"] + c, :] + v)
            if i == nlev - 1:
                return out
            inner = block(f[c:c + cn, :], i + 1)                 # proj_down(v) input
            pu = pus[i]
            return out + mat1x1(pu["off"], pu["M"], pu["K"], inner)

        x = x_ref[0].astype(jnp.float32)                         # (C, HW)
        out_ref[0] = block(x, 0).astype(out_ref.dtype)

    return kernel


def _boundary_masks(H, W):
    """(9, H*W) bf16 validity masks for the 9 conv taps (per-image layout)."""
    q = jnp.arange(H * W, dtype=jnp.int32)
    h = q // W
    w = q % W
    rows = []
    for ky in range(3):
        for kx in range(3):
            dy, dx = ky - 1, kx - 1
            valid = ((h + dy >= 0) & (h + dy < H) &
                     (w + dx >= 0) & (w + dx < W))
            rows.append(valid.astype(jnp.float32))
    return jnp.stack(rows, axis=0).astype(jnp.bfloat16)


def fractal_block_forward(x_nchw, w_packed, b_packed, masks, *, plan):
    """x_nchw: (N, C, H, W) f32 (PyTorch layout). Returns (N, C, H, W)."""
    N, C, H, W = x_nchw.shape
    HW = H * W
    x = x_nchw.reshape(N, C, HW)                                 # free, no transpose
    y = pl.pallas_call(
        _make_block_kernel(plan, H, W),
        out_shape=jax.ShapeDtypeStruct((N, C, HW), x_nchw.dtype),
        grid=(N,),
        in_specs=[
            pl.BlockSpec((1, C, HW), lambda n: (n, 0, 0)),       # per-image activations
            pl.BlockSpec(masks.shape, lambda n: (0, 0)),         # boundary masks
            pl.BlockSpec(w_packed.shape, lambda n: (0, 0)),      # all weights: one DMA
            pl.BlockSpec(b_packed.shape, lambda n: (0, 0)),      # all biases:  one DMA
        ],
        out_specs=pl.BlockSpec((1, C, HW), lambda n: (n, 0, 0)),
        scratch_shapes=[pltpu.VMEM((9 * plan["padded"][0], HW), jnp.bfloat16)],
        compiler_params=pltpu.CompilerParams(
            dimension_semantics=("parallel",)),                  # both TCs on v7x
    )(x, masks, w_packed, b_packed)
    return y.reshape(N, C, H, W)


# ---------------------------------------------------------------------------
# Deterministic parameter init (mirrors the PyTorch module), eval-mode BN fold,
# channel padding of the innermost level, and packing into the two buffers.
# ---------------------------------------------------------------------------
def _init_raw_levels(key, C, levels):
    lvls = []
    c = C
    for lkey in jax.random.split(key, levels):
        ks = jax.random.split(lkey, 12)

        def n(k, shape, s=0.1):
            return s * jax.random.normal(k, shape, jnp.float32)

        d = dict(
            w1=n(ks[0], (c, c, 3, 3)),                           # torch OIHW
            g1=1.0 + n(ks[1], (c,)), be1=n(ks[2], (c,)), m1=n(ks[3], (c,)),
            v1=0.5 + jax.random.uniform(ks[4], (c,), jnp.float32),
            w2=n(ks[5], (c, c, 3, 3)),
            g2=1.0 + n(ks[6], (c,)), be2=n(ks[7], (c,)), m2=n(ks[8], (c,)),
            v2=0.5 + jax.random.uniform(ks[9], (c,), jnp.float32),
        )
        if len(lvls) < levels - 1:
            d["pd"] = n(ks[10], (c // 2, c))                     # 1x1 proj_down
            d["pu"] = n(ks[11], (c, c // 2))                     # 1x1 proj_up
        lvls.append(d)
        c //= 2
    return lvls


def _fold_bn(gamma, beta, mean, var, eps=1e-5):
    scale = gamma / jnp.sqrt(var + eps)
    return scale, beta - mean * scale


def _conv_mat(w_oihw, scale):
    # OIHW -> (Cout, 9*Cin), col = (ky*3+kx)*Cin + ci, BN scale folded in.
    Co, Ci = w_oihw.shape[:2]
    wm = jnp.transpose(w_oihw, (0, 2, 3, 1)).reshape(Co, 9 * Ci)
    return wm * scale[:, None]


def _prep_levels(raw_levels):
    out = []
    for d in raw_levels:
        s1, b1 = _fold_bn(d["g1"], d["be1"], d["m1"], d["v1"])
        s2, b2 = _fold_bn(d["g2"], d["be2"], d["m2"], d["v2"])
        e = dict(w1=_conv_mat(d["w1"], s1), b1=b1,
                 w2=_conv_mat(d["w2"], s2), b2=b2)
        if "pd" in d:
            e["pd"] = d["pd"]
            e["pu"] = d["pu"]
        out.append(e)
    return out


def _pack_params(prepped, plan):
    kmax = plan["kmax"]
    raw_w, padded = plan["raw"], plan["padded"]
    nlev = len(prepped)

    def pad_conv(w, rc, pc):
        # (rc, 9*rc) -> (pc, 9*pc): zero-pad out rows and per-tap input cols.
        w3 = jnp.pad(w.reshape(rc, 9, rc), ((0, pc - rc), (0, 0), (0, pc - rc)))
        return w3.reshape(pc, 9 * pc)

    w_blocks, b_blocks = [], []
    for i, p in enumerate(prepped):
        rc, pc = raw_w[i], padded[i]
        is_last = (i == nlev - 1)
        w1p = pad_conv(p["w1"], rc, pc)
        w2p = pad_conv(p["w2"], rc, pc)
        rows1 = pc + (padded[i + 1] if not is_last else 0)
        blk1 = jnp.zeros((rows1, kmax), jnp.float32).at[:pc, :9 * pc].set(w1p)
        if not is_last:
            rn, pn = raw_w[i + 1], padded[i + 1]
            pd = jnp.pad(p["pd"], ((0, pn - rn), (0, pc - rc)))
            # fused proj_down rows live on the center-tap columns only
            blk1 = blk1.at[pc:pc + pn, 4 * pc:5 * pc].set(pd)
        blk2 = jnp.zeros((pc, kmax), jnp.float32).at[:, :9 * pc].set(w2p)
        w_blocks += [blk1, blk2]
        b_blocks += [jnp.pad(p["b1"], (0, pc - rc)).reshape(pc, 1),
                     jnp.pad(p["b2"], (0, pc - rc)).reshape(pc, 1)]
    for i in range(nlev - 1):
        rc, pc = raw_w[i], padded[i]
        rn, pn = raw_w[i + 1], padded[i + 1]
        pu = jnp.pad(prepped[i]["pu"], ((0, pc - rc), (0, pn - rn)))
        w_blocks.append(jnp.zeros((pc, kmax), jnp.float32).at[:, :pn].set(pu))
    w_packed = jnp.concatenate(w_blocks, axis=0).astype(jnp.bfloat16)
    b_packed = jnp.concatenate(b_blocks, axis=0)
    assert w_packed.shape == (plan["w_rows"], kmax)
    assert b_packed.shape == (plan["b_rows"], 1)
    return w_packed, b_packed


# ---------------------------------------------------------------------------
# Pure-JAX reference (NHWC, same folded-BN weights, bf16 matmul operands).
# ---------------------------------------------------------------------------
def _ref_conv3x3(x_nhwc, wmat, bias):
    _, H, W, _ = x_nhwc.shape
    xp = jnp.pad(x_nhwc, ((0, 0), (1, 1), (1, 1), (0, 0)))
    taps = jnp.concatenate(
        [xp[:, ky:ky + H, kx:kx + W, :] for ky in range(3) for kx in range(3)],
        axis=-1)                                                 # (N,H,W,9*Cin)
    y = jnp.einsum("nhwk,ok->nhwo", taps.astype(jnp.bfloat16),
                   wmat.astype(jnp.bfloat16), preferred_element_type=jnp.float32)
    return y + bias.reshape(1, 1, 1, -1)


def _ref_mat1x1(x_nhwc, w):
    return jnp.einsum("nhwc,oc->nhwo", x_nhwc.astype(jnp.bfloat16),
                      w.astype(jnp.bfloat16), preferred_element_type=jnp.float32)


def _ref_block(prepped, x, i=0):
    p = prepped[i]
    y = jax.nn.silu(_ref_conv3x3(x, p["w1"], p["b1"]))
    out = jax.nn.silu(_ref_conv3x3(y, p["w2"], p["b2"]) + x)
    if i == len(prepped) - 1:
        return out
    inner = _ref_block(prepped, _ref_mat1x1(x, p["pd"]), i + 1)
    return out + _ref_mat1x1(inner, p["pu"])


# ---------------------------------------------------------------------------
if __name__ == "__main__":
    CHANNELS, LEVELS = 16, 3
    N, H, W = 2, 16, 16

    key = jax.random.PRNGKey(0)
    kp, kx = jax.random.split(key)
    raw = _init_raw_levels(kp, CHANNELS, LEVELS)
    prepped = _prep_levels(raw)
    plan = _build_plan(CHANNELS, LEVELS)
    w_packed, b_packed = _pack_params(prepped, plan)
    masks = _boundary_masks(H, W)

    x = jax.random.normal(kx, (N, CHANNELS, H, W), jnp.float32)  # NCHW like torch

    fwd = jax.jit(functools.partial(fractal_block_forward, plan=plan))
    out = jax.block_until_ready(fwd(x, w_packed, b_packed, masks))

    # Self-check vs a plain-JAX NHWC reference using the same folded-BN weights
    # and bf16 matmul operands.  NOTE: bf16 operands + the approx EUP reciprocal
    # in SiLU mean ~1e-2-level deviation from a pure-f32 PyTorch forward.
    x_nhwc = jnp.transpose(x, (0, 2, 3, 1))
    ref = jnp.transpose(_ref_block(prepped, x_nhwc), (0, 3, 1, 2))
    assert out.shape == ref.shape == (N, CHANNELS, H, W)
    max_err = float(jnp.max(jnp.abs(out - ref)))
    assert max_err < 3e-2, f"max abs err {max_err}"

    print("KERNEL_OK")
</pallas_src>

<mosaic_0001>
module attributes {stable_mosaic.version = 11 : i64} {
  func.func @kernel(%arg0: i32, %arg1: memref<1x16x256xf32, #tpu.memory_space<vmem>>, %arg2: memref<9x256xbf16, #tpu.memory_space<vmem>>, %arg3: memref<104x144xbf16, #tpu.memory_space<vmem>>, %arg4: memref<64x1xf32, #tpu.memory_space<vmem>>, %arg5: memref<1x16x256xf32, #tpu.memory_space<vmem>>, %arg6: memref<144x256xbf16, #tpu.memory_space<vmem>>) attributes {dimension_semantics = [#tpu.dimension_semantics<parallel>], iteration_bounds = array<i64: 2>, scalar_prefetch = 0 : i64, scratch_operands = 1 : i64, tpu.core_type = #tpu.core_type<tc>, window_params = [{transform_indices = @transform_0, window_bounds = array<i64: 1, 16, 256>}, {pipeline_mode = #tpu.pipeline_mode<synchronous>, transform_indices = @transform_1, window_bounds = array<i64: 9, 256>}, {pipeline_mode = #tpu.pipeline_mode<synchronous>, transform_indices = @transform_2, window_bounds = array<i64: 104, 144>}, {pipeline_mode = #tpu.pipeline_mode<synchronous>, transform_indices = @transform_3, window_bounds = array<i64: 64, 1>}, {transform_indices = @transform_4, window_bounds = array<i64: 1, 16, 256>}]} {
    %c0 = arith.constant 0 : index
    %c0_0 = arith.constant 0 : index
    %0 = vector.load %arg2[%c0, %c0_0] : memref<9x256xbf16, #tpu.memory_space<vmem>>, vector<9x256xbf16>
    %1 = vector.extract_strided_slice %0 {offsets = [0, 0], sizes = [1, 256], strides = [1, 1]} : vector<9x256xbf16> to vector<1x256xbf16>
    %2 = vector.shape_cast %1 : vector<1x256xbf16> to vector<1x256xbf16>
    %3 = vector.broadcast %2 : vector<1x256xbf16> to vector<8x256xbf16>
    %4 = vector.extract_strided_slice %0 {offsets = [1, 0], sizes = [1, 256], strides = [1, 1]} : vector<9x256xbf16> to vector<1x256xbf16>
    %5 = vector.shape_cast %4 : vector<1x256xbf16> to vector<1x256xbf16>
    %6 = vector.broadcast %5 : vector<1x256xbf16> to vector<8x256xbf16>
    %7 = vector.extract_strided_slice %0 {offsets = [2, 0], sizes = [1, 256], strides = [1, 1]} : vector<9x256xbf16> to vector<1x256xbf16>
    %8 = vector.shape_cast %7 : vector<1x256xbf16> to vector<1x256xbf16>
    %9 = vector.broadcast %8 : vector<1x256xbf16> to vector<8x256xbf16>
    %10 = vector.extract_strided_slice %0 {offsets = [3, 0], sizes = [1, 256], strides = [1, 1]} : vector<9x256xbf16> to vector<1x256xbf16>
    %11 = vector.shape_cast %10 : vector<1x256xbf16> to vector<1x256xbf16>
    %12 = vector.broadcast %11 : vector<1x256xbf16> to vector<8x256xbf16>
    %13 = vector.extract_strided_slice %0 {offsets = [5, 0], sizes = [1, 256], strides = [1, 1]} : vector<9x256xbf16> to vector<1x256xbf16>
    %14 = vector.shape_cast %13 : vector<1x256xbf16> to vector<1x256xbf16>
    %15 = vector.broadcast %14 : vector<1x256xbf16> to vector<8x256xbf16>
    %16 = vector.extract_strided_slice %0 {offsets = [6, 0], sizes = [1, 256], strides = [1, 1]} : vector<9x256xbf16> to vector<1x256xbf16>
    %17 = vector.shape_cast %16 : vector<1x256xbf16> to vector<1x256xbf16>
    %18 = vector.broadcast %17 : vector<1x256xbf16> to vector<8x256xbf16>
    %19 = vector.extract_strided_slice %0 {offsets = [7, 0], sizes = [1, 256], strides = [1, 1]} : vector<9x256xbf16> to vector<1x256xbf16>
    %20 = vector.shape_cast %19 : vector<1x256xbf16> to vector<1x256xbf16>
    %21 = vector.broadcast %20 : vector<1x256xbf16> to vector<8x256xbf16>
    %22 = vector.extract_strided_slice %0 {offsets = [8, 0], sizes = [1, 256], strides = [1, 1]} : vector<9x256xbf16> to vector<1x256xbf16>
    %23 = vector.shape_cast %22 : vector<1x256xbf16> to vector<1x256xbf16>
    %24 = vector.broadcast %23 : vector<1x256xbf16> to vector<8x256xbf16>
    %25 = vector.extract_strided_slice %0 {offsets = [0, 0], sizes = [1, 256], strides = [1, 1]} : vector<9x256xbf16> to vector<1x256xbf16>
    %26 = vector.shape_cast %25 : vector<1x256xbf16> to vector<1x256xbf16>
    %27 = vector.broadcast %26 : vector<1x256xbf16> to vector<16x256xbf16>
    %28 = vector.extract_strided_slice %0 {offsets = [1, 0], sizes = [1, 256], strides = [1, 1]} : vector<9x256xbf16> to vector<1x256xbf16>
    %29 = vector.shape_cast %28 : vector<1x256xbf16> to vector<1x256xbf16>
    %30 = vector.broadcast %29 : vector<1x256xbf16> to vector<16x256xbf16>
    %31 = vector.extract_strided_slice %0 {offsets = [2, 0], sizes = [1, 256], strides = [1, 1]} : vector<9x256xbf16> to vector<1x256xbf16>
    %32 = vector.shape_cast %31 : vector<1x256xbf16> to vector<1x256xbf16>
    %33 = vector.broadcast %32 : vector<1x256xbf16> to vector<16x256xbf16>
    %34 = vector.extract_strided_slice %0 {offsets = [3, 0], sizes = [1, 256], strides = [1, 1]} : vector<9x256xbf16> to vector<1x256xbf16>
    %35 = vector.shape_cast %34 : vector<1x256xbf16> to vector<1x256xbf16>
    %36 = vector.broadcast %35 : vector<1x256xbf16> to vector<16x256xbf16>
    %37 = vector.extract_strided_slice %0 {offsets = [5, 0], sizes = [1, 256], strides = [1, 1]} : vector<9x256xbf16> to vector<1x256xbf16>
    %38 = vector.shape_cast %37 : vector<1x256xbf16> to vector<1x256xbf16>
    %39 = vector.broadcast %38 : vector<1x256xbf16> to vector<16x256xbf16>
    %40 = vector.extract_strided_slice %0 {offsets = [6, 0], sizes = [1, 256], strides = [1, 1]} : vector<9x256xbf16> to vector<1x256xbf16>
    %41 = vector.shape_cast %40 : vector<1x256xbf16> to vector<1x256xbf16>
    %42 = vector.broadcast %41 : vector<1x256xbf16> to vector<16x256xbf16>
    %43 = vector.extract_strided_slice %0 {offsets = [7, 0], sizes = [1, 256], strides = [1, 1]} : vector<9x256xbf16> to vector<1x256xbf16>
    %44 = vector.shape_cast %43 : vector<1x256xbf16> to vector<1x256xbf16>
    %45 = vector.broadcast %44 : vector<1x256xbf16> to vector<16x256xbf16>
    %46 = vector.extract_strided_slice %0 {offsets = [8, 0], sizes = [1, 256], strides = [1, 1]} : vector<9x256xbf16> to vector<1x256xbf16>
    %47 = vector.shape_cast %46 : vector<1x256xbf16> to vector<1x256xbf16>
    %48 = vector.broadcast %47 : vector<1x256xbf16> to vector<16x256xbf16>
    %c0_1 = arith.constant 0 : index
    %c0_2 = arith.constant 0 : index
    %c0_3 = arith.constant 0 : index
    %49 = vector.load %arg1[%c0_1, %c0_2, %c0_3] : memref<1x16x256xf32, #tpu.memory_space<vmem>>, vector<1x16x256xf32>
    %50 = vector.shape_cast %49 : vector<1x16x256xf32> to vector<16x256xf32>
    %c17_i32 = arith.constant 17 : i32
    %51 = tpu.dynamic_rotate %50 by %c17_i32 dim 1 : vector<16x256xf32>, i32 -> vector<16x256xf32>
    %52 = arith.truncf %51 : vector<16x256xf32> to vector<16x256xbf16>
    %53 = arith.mulf %52, %27 : vector<16x256xbf16>
    %c0_4 = arith.constant 0 : index
    %c0_5 = arith.constant 0 : index
    %54 = vector.load %arg6[%c0_4, %c0_5] : memref<144x256xbf16, #tpu.memory_space<vmem>>, vector<16x256xbf16>
    tpu.vector_store %arg6[%c0_4, %c0_5], %53 {strides = array<i32>} : memref<144x256xbf16, #tpu.memory_space<vmem>>, vector<16x256xbf16>,
    %c16_i32 = arith.constant 16 : i32
    %55 = tpu.dynamic_rotate %50 by %c16_i32 dim 1 : vector<16x256xf32>, i32 -> vector<16x256xf32>
    %56 = arith.truncf %55 : vector<16x256xf32> to vector<16x256xbf16>
    %57 = arith.mulf %56, %30 : vector<16x256xbf16>
    %c16 = arith.constant 16 : index
    %c0_6 = arith.constant 0 : index
    %58 = vector.load %arg6[%c16, %c0_6] : memref<144x256xbf16, #tpu.memory_space<vmem>>, vector<16x256xbf16>
    tpu.vector_store %arg6[%c16, %c0_6], %57 {strides = array<i32>} : memref<144x256xbf16, #tpu.memory_space<vmem>>, vector<16x256xbf16>,
    %c15_i32 = arith.constant 15 : i32
    %59 = tpu.dynamic_rotate %50 by %c15_i32 dim 1 : vector<16x256xf32>, i32 -> vector<16x256xf32>
    %60 = arith.truncf %59 : vector<16x256xf32> to vector<16x256xbf16>
    %61 = arith.mulf %60, %33 : vector<16x256xbf16>
    %c32 = arith.constant 32 : index
    %c0_7 = arith.constant 0 : index
    %62 = vector.load %arg6[%c32, %c0_7] : memref<144x256xbf16, #tpu.memory_space<vmem>>, vector<16x256xbf16>
    tpu.vector_store %arg6[%c32, %c0_7], %61 {strides = array<i32>} : memref<144x256xbf16, #tpu.memory_space<vmem>>, vector<16x256xbf16>,
    %c1_i32 = arith.constant 1 : i32
    %63 = tpu.dynamic_rotate %50 by %c1_i32 dim 1 : vector<16x256xf32>, i32 -> vector<16x256xf32>
    %64 = arith.truncf %63 : vector<16x256xf32> to vector<16x256xbf16>
    %65 = arith.mulf %64, %36 : vector<16x256xbf16>
    %c48 = arith.constant 48 : index
    %c0_8 = arith.constant 0 : index
    %66 = vector.load %arg6[%c48, %c0_8] : memref<144x256xbf16, #tpu.memory_space<vmem>>, vector<16x256xbf16>
    tpu.vector_store %arg6[%c48, %c0_8], %65 {strides = array<i32>} : memref<144x256xbf16, #tpu.memory_space<vmem>>, vector<16x256xbf16>,
    %67 = arith.truncf %50 : vector<16x256xf32> to vector<16x256xbf16>
    %c64 = arith.constant 64 : index
    %c0_9 = arith.constant 0 : index
    %68 = vector.load %arg6[%c64, %c0_9] : memref<144x256xbf16, #tpu.memory_space<vmem>>, vector<16x256xbf16>
    tpu.vector_store %arg6[%c64, %c0_9], %67 {strides = array<i32>} : memref<144x256xbf16, #tpu.memory_space<vmem>>, vector<16x256xbf16>,
    %c255_i32 = arith.constant 255 : i32
    %69 = tpu.dynamic_rotate %50 by %c255_i32 dim 1 : vector<16x256xf32>, i32 -> vector<16x256xf32>
    %70 = arith.truncf %69 : vector<16x256xf32> to vector<16x256xbf16>
    %71 = arith.mulf %70, %39 : vector<16x256xbf16>
    %c80 = arith.constant 80 : index
    %c0_10 = arith.constant 0 : index
    %72 = vector.load %arg6[%c80, %c0_10] : memref<144x256xbf16, #tpu.memory_space<vmem>>, vector<16x256xbf16>
    tpu.vector_store %arg6[%c80, %c0_10], %71 {strides = array<i32>} : memref<144x256xbf16, #tpu.memory_space<vmem>>, vector<16x256xbf16>,
    %c241_i32 = arith.constant 241 : i32
    %73 = tpu.dynamic_rotate %50 by %c241_i32 dim 1 : vector<16x256xf32>, i32 -> vector<16x256xf32>
    %74 = arith.truncf %73 : vector<16x256xf32> to vector<16x256xbf16>
    %75 = arith.mulf %74, %42 : vector<16x256xbf16>
    %c96 = arith.constant 96 : index
    %c0_11 = arith.constant 0 : index
    %76 = vector.load %arg6[%c96, %c0_11] : memref<144x256xbf16, #tpu.memory_space<vmem>>, vector<16x256xbf16>
    tpu.vector_store %arg6[%c96, %c0_11], %75 {strides = array<i32>} : memref<144x256xbf16, #tpu.memory_space<vmem>>, vector<16x256xbf16>,
    %c240_i32 = arith.constant 240 : i32
    %77 = tpu.dynamic_rotate %50 by %c240_i32 dim 1 : vector<16x256xf32>, i32 -> vector<16x256xf32>
    %78 = arith.truncf %77 : vector<16x256xf32> to vector<16x256xbf16>
    %79 = arith.mulf %78, %45 : vector<16x256xbf16>
    %c112 = arith.constant 112 : index
    %c0_12 = arith.constant 0 : index
    %80 = vector.load %arg6[%c112, %c0_12] : memref<144x256xbf16, #tpu.memory_space<vmem>>, vector<16x256xbf16>
    tpu.vector_store %arg6[%c112, %c0_12], %79 {strides = array<i32>} : memref<144x256xbf16, #tpu.memory_space<vmem>>, vector<16x256xbf16>,
    %c239_i32 = arith.constant 239 : i32
    %81 = tpu.dynamic_rotate %50 by %c239_i32 dim 1 : vector<16x256xf32>, i32 -> vector<16x256xf32>
    %82 = arith.truncf %81 : vector<16x256xf32> to vector<16x256xbf16>
    %83 = arith.mulf %82, %48 : vector<16x256xbf16>
    %c128 = arith.constant 128 : index
    %c0_13 = arith.constant 0 : index
    %84 = vector.load %arg6[%c128, %c0_13] : memref<144x256xbf16, #tpu.memory_space<vmem>>, vector<16x256xbf16>
    tpu.vector_store %arg6[%c128, %c0_13], %83 {strides = array<i32>} : memref<144x256xbf16, #tpu.memory_space<vmem>>, vector<16x256xbf16>,
    %c0_14 = arith.constant 0 : index
    %c0_15 = arith.constant 0 : index
    %85 = vector.load %arg3[%c0_14, %c0_15] : memref<104x144xbf16, #tpu.memory_space<vmem>>, vector<24x144xbf16>
    %c0_16 = arith.constant 0 : index
    %c0_17 = arith.constant 0 : index
    %86 = vector.load %arg6[%c0_16, %c0_17] : memref<144x256xbf16, #tpu.memory_space<vmem>>, vector<144x256xbf16>
    %cst = arith.constant dense<0.000000e+00> : vector<24x256xf32>
    %87 = tpu.matmul %85, %86, %cst {dimension_numbers = #tpu.dot_dimension_numbers<[1], [0], [0], [1], [0, 0, 1, 1], [], []>} : vector<24x144xbf16>, vector<144x256xbf16>, vector<24x256xf32> -> vector<24x256xf32>
    %88 = vector.extract_strided_slice %87 {offsets = [0, 0], sizes = [16, 256], strides = [1, 1]} : vector<24x256xf32> to vector<16x256xf32>
    %c0_18 = arith.constant 0 : index
    %c0_19 = arith.constant 0 : index
    %89 = vector.load %arg4[%c0_18, %c0_19] : memref<64x1xf32, #tpu.memory_space<vmem>>, vector<16x1xf32>
    %90 = vector.broadcast %89 : vector<16x1xf32> to vector<16x256xf32>
    %91 = arith.addf %88, %90 : vector<16x256xf32>
    %cst_20 = arith.constant 0.000000e+00 : f32
    %92 = vector.broadcast %cst_20 : f32 to vector<16x256xf32>
    %93 = arith.subf %92, %91 : vector<16x256xf32>
    %94 = math.exp %93 : vector<16x256xf32>
    %cst_21 = arith.constant 1.000000e+00 : f32
    %95 = vector.broadcast %cst_21 : f32 to vector<16x256xf32>
    %96 = arith.addf %95, %94 : vector<16x256xf32>
    %97 = tpu.reciprocal %96 {approx = true} : vector<16x256xf32> -> vector<16x256xf32>
    %98 = arith.mulf %91, %97 : vector<16x256xf32>
    %c17_i32_22 = arith.constant 17 : i32
    %99 = tpu.dynamic_rotate %98 by %c17_i32_22 dim 1 : vector<16x256xf32>, i32 -> vector<16x256xf32>
    %100 = arith.truncf %99 : vector<16x256xf32> to vector<16x256xbf16>
    %101 = arith.mulf %100, %27 : vector<16x256xbf16>
    %c0_23 = arith.constant 0 : index
    %c0_24 = arith.constant 0 : index
    %102 = vector.load %arg6[%c0_23, %c0_24] : memref<144x256xbf16, #tpu.memory_space<vmem>>, vector<16x256xbf16>
    tpu.vector_store %arg6[%c0_23, %c0_24], %101 {strides = array<i32>} : memref<144x256xbf16, #tpu.memory_space<vmem>>, vector<16x256xbf16>,
    %c16_i32_25 = arith.constant 16 : i32
    %103 = tpu.dynamic_rotate %98 by %c16_i32_25 dim 1 : vector<16x256xf32>, i32 -> vector<16x256xf32>
    %104 = arith.truncf %103 : vector<16x256xf32> to vector<16x256xbf16>
    %105 = arith.mulf %104, %30 : vector<16x256xbf16>
    %c16_26 = arith.constant 16 : index
    %c0_27 = arith.constant 0 : index
    %106 = vector.load %arg6[%c16_26, %c0_27] : memref<144x256xbf16, #tpu.memory_space<vmem>>, vector<16x256xbf16>
    tpu.vector_store %arg6[%c16_26, %c0_27], %105 {strides = array<i32>} : memref<144x256xbf16, #tpu.memory_space<vmem>>, vector<16x256xbf16>,
    %c15_i32_28 = arith.constant 15 : i32
    %107 = tpu.dynamic_rotate %98 by %c15_i32_28 dim 1 : vector<16x256xf32>, i32 -> vector<16x256xf32>
    %108 = arith.truncf %107 : vector<16x256xf32> to vector<16x256xbf16>
    %109 = arith.mulf %108, %33 : vector<16x256xbf16>
    %c32_29 = arith.constant 32 : index
    %c0_30 = arith.constant 0 : index
    %110 = vector.load %arg6[%c32_29, %c0_30] : memref<144x256xbf16, #tpu.memory_space<vmem>>, vector<16x256xbf16>
    tpu.vector_store %arg6[%c32_29, %c0_30], %109 {strides = array<i32>} : memref<144x256xbf16, #tpu.memory_space<vmem>>, vector<16x256xbf16>,
    %c1_i32_31 = arith.constant 1 : i32
    %111 = tpu.dynamic_rotate %98 by %c1_i32_31 dim 1 : vector<16x256xf32>, i32 -> vector<16x256xf32>
    %112 = arith.truncf %111 : vector<16x256xf32> to vector<16x256xbf16>
    %113 = arith.mulf %112, %36 : vector<16x256xbf16>
    %c48_32 = arith.constant 48 : index
    %c0_33 = arith.constant 0 : index
    %114 = vector.load %arg6[%c48_32, %c0_33] : memref<144x256xbf16, #tpu.memory_space<vmem>>, vector<16x256xbf16>
    tpu.vector_store %arg6[%c48_32, %c0_33], %113 {strides = array<i32>} : memref<144x256xbf16, #tpu.memory_space<vmem>>, vector<16x256xbf16>,
    %115 = arith.truncf %98 : vector<16x256xf32> to vector<16x256xbf16>
    %c64_34 = arith.constant 64 : index
    %c0_35 = arith.constant 0 : index
    %116 = vector.load %arg6[%c64_34, %c0_35] : memref<144x256xbf16, #tpu.memory_space<vmem>>, vector<16x256xbf16>
    tpu.vector_store %arg6[%c64_34, %c0_35], %115 {strides = array<i32>} : memref<144x256xbf16, #tpu.memory_space<vmem>>, vector<16x256xbf16>,
    %c255_i32_36 = arith.constant 255 : i32
    %117 = tpu.dynamic_rotate %98 by %c255_i32_36 dim 1 : vector<16x256xf32>, i32 -> vector<16x256xf32>
    %118 = arith.truncf %117 : vector<16x256xf32> to vector<16x256xbf16>
    %119 = arith.mulf %118, %39 : vector<16x256xbf16>
    %c80_37 = arith.constant 80 : index
    %c0_38 = arith.constant 0 : index
    %120 = vector.load %arg6[%c80_37, %c0_38] : memref<144x256xbf16, #tpu.memory_space<vmem>>, vector<16x256xbf16>
    tpu.vector_store %arg6[%c80_37, %c0_38], %119 {strides = array<i32>} : memref<144x256xbf16, #tpu.memory_space<vmem>>, vector<16x256xbf16>,
    %c241_i32_39 = arith.constant 241 : i32
    %121 = tpu.dynamic_rotate %98 by %c241_i32_39 dim 1 : vector<16x256xf32>, i32 -> vector<16x256xf32>
    %122 = arith.truncf %121 : vector<16x256xf32> to vector<16x256xbf16>
    %123 = arith.mulf %122, %42 : vector<16x256xbf16>
    %c96_40 = arith.constant 96 : index
    %c0_41 = arith.constant 0 : index
    %124 = vector.load %arg6[%c96_40, %c0_41] : memref<144x256xbf16, #tpu.memory_space<vmem>>, vector<16x256xbf16>
    tpu.vector_store %arg6[%c96_40, %c0_41], %123 {strides = array<i32>} : memref<144x256xbf16, #tpu.memory_space<vmem>>, vector<16x256xbf16>,
    %c240_i32_42 = arith.constant 240 : i32
    %125 = tpu.dynamic_rotate %98 by %c240_i32_42 dim 1 : vector<16x256xf32>, i32 -> vector<16x256xf32>
    %126 = arith.truncf %125 : vector<16x256xf32> to vector<16x256xbf16>
    %127 = arith.mulf %126, %45 : vector<16x256xbf16>
    %c112_43 = arith.constant 112 : index
    %c0_44 = arith.constant 0 : index
    %128 = vector.load %arg6[%c112_43, %c0_44] : memref<144x256xbf16, #tpu.memory_space<vmem>>, vector<16x256xbf16>
    tpu.vector_store %arg6[%c112_43, %c0_44], %127 {strides = array<i32>} : memref<144x256xbf16, #tpu.memory_space<vmem>>, vector<16x256xbf16>,
    %c239_i32_45 = arith.constant 239 : i32
    %129 = tpu.dynamic_rotate %98 by %c239_i32_45 dim 1 : vector<16x256xf32>, i32 -> vector<16x256xf32>
    %130 = arith.truncf %129 : vector<16x256xf32> to vector<16x256xbf16>
    %131 = arith.mulf %130, %48 : vector<16x256xbf16>
    %c128_46 = arith.constant 128 : index
    %c0_47 = arith.constant 0 : index
    %132 = vector.load %arg6[%c128_46, %c0_47] : memref<144x256xbf16, #tpu.memory_space<vmem>>, vector<16x256xbf16>
    tpu.vector_store %arg6[%c128_46, %c0_47], %131 {strides = array<i32>} : memref<144x256xbf16, #tpu.memory_space<vmem>>, vector<16x256xbf16>,
    %c24 = arith.constant 24 : index
    %c0_48 = arith.constant 0 : index
    %133 = vector.load %arg3[%c24, %c0_48] : memref<104x144xbf16, #tpu.memory_space<vmem>>, vector<16x144xbf16>
    %c0_49 = arith.constant 0 : index
    %c0_50 = arith.constant 0 : index
    %134 = vector.load %arg6[%c0_49, %c0_50] : memref<144x256xbf16, #tpu.memory_space<vmem>>, vector<144x256xbf16>
    %cst_51 = arith.constant dense<0.000000e+00> : vector<16x256xf32>
    %135 = tpu.matmul %133, %134, %cst_51 {dimension_numbers = #tpu.dot_dimension_numbers<[1], [0], [0], [1], [0, 0, 1, 1], [], []>} : vector<16x144xbf16>, vector<144x256xbf16>, vector<16x256xf32> -> vector<16x256xf32>
    %c16_52 = arith.constant 16 : index
    %c0_53 = arith.constant 0 : index
    %136 = vector.load %arg4[%c16_52, %c0_53] : memref<64x1xf32, #tpu.memory_space<vmem>>, vector<16x1xf32>
    %137 = vector.broadcast %136 : vector<16x1xf32> to vector<16x256xf32>
    %138 = arith.addf %135, %137 : vector<16x256xf32>
    %139 = arith.addf %138, %50 : vector<16x256xf32>
    %cst_54 = arith.constant 0.000000e+00 : f32
    %140 = vector.broadcast %cst_54 : f32 to vector<16x256xf32>
    %141 = arith.subf %140, %139 : vector<16x256xf32>
    %142 = math.exp %141 : vector<16x256xf32>
    %cst_55 = arith.constant 1.000000e+00 : f32
    %143 = vector.broadcast %cst_55 : f32 to vector<16x256xf32>
    %144 = arith.addf %143, %142 : vector<16x256xf32>
    %145 = tpu.reciprocal %144 {approx = true} : vector<16x256xf32> -> vector<16x256xf32>
    %146 = arith.mulf %139, %145 : vector<16x256xf32>
    %147 = vector.extract_strided_slice %87 {offsets = [16, 0], sizes = [8, 256], strides = [1, 1]} : vector<24x256xf32> to vector<8x256xf32>
    %c17_i32_56 = arith.constant 17 : i32
    %148 = tpu.dynamic_rotate %147 by %c17_i32_56 dim 1 : vector<8x256xf32>, i32 -> vector<8x256xf32>
    %149 = arith.truncf %148 : vector<8x256xf32> to vector<8x256xbf16>
    %150 = arith.mulf %149, %3 : vector<8x256xbf16>
    %c0_57 = arith.constant 0 : index
    %c0_58 = arith.constant 0 : index
    %151 = vector.load %arg6[%c0_57, %c0_58] : memref<144x256xbf16, #tpu.memory_space<vmem>>, vector<8x256xbf16>
    tpu.vector_store %arg6[%c0_57, %c0_58], %150 {strides = array<i32>} : memref<144x256xbf16, #tpu.memory_space<vmem>>, vector<8x256xbf16>,
    %c16_i32_59 = arith.constant 16 : i32
    %152 = tpu.dynamic_rotate %147 by %c16_i32_59 dim 1 : vector<8x256xf32>, i32 -> vector<8x256xf32>
    %153 = arith.truncf %152 : vector<8x256xf32> to vector<8x256xbf16>
    %154 = arith.mulf %153, %6 : vector<8x256xbf16>
    %c8 = arith.constant 8 : index
    %c0_60 = arith.constant 0 : index
    %155 = vector.load %arg6[%c8, %c0_60] : memref<144x256xbf16, #tpu.memory_space<vmem>>, vector<8x256xbf16>
    tpu.vector_store %arg6[%c8, %c0_60], %154 {strides = array<i32>} : memref<144x256xbf16, #tpu.memory_space<vmem>>, vector<8x256xbf16>,
    %c15_i32_61 = arith.constant 15 : i32
    %156 = tpu.dynamic_rotate %147 by %c15_i32_61 dim 1 : vector<8x256xf32>, i32 -> vector<8x256xf32>
    %157 = arith.truncf %156 : vector<8x256xf32> to vector<8x256xbf16>
    %158 = arith.mulf %157, %9 : vector<8x256xbf16>
    %c16_62 = arith.constant 16 : index
    %c0_63 = arith.constant 0 : index
    %159 = vector.load %arg6[%c16_62, %c0_63] : memref<144x256xbf16, #tpu.memory_space<vmem>>, vector<8x256xbf16>
    tpu.vector_store %arg6[%c16_62, %c0_63], %158 {strides = array<i32>} : memref<144x256xbf16, #tpu.memory_space<vmem>>, vector<8x256xbf16>,
    %c1_i32_64 = arith.constant 1 : i32
    %160 = tpu.dynamic_rotate %147 by %c1_i32_64 dim 1 : vector<8x256xf32>, i32 -> vector<8x256xf32>
    %161 = arith.truncf %160 : vector<8x256xf32> to vector<8x256xbf16>
    %162 = arith.mulf %161, %12 : vector<8x256xbf16>
    %c24_65 = arith.constant 24 : index
    %c0_66 = arith.constant 0 : index
    %163 = vector.load %arg6[%c24_65, %c0_66] : memref<144x256xbf16, #tpu.memory_space<vmem>>, vector<8x256xbf16>
    tpu.vector_store %arg6[%c24_65, %c0_66], %162 {strides = array<i32>} : memref<144x256xbf16, #tpu.memory_space<vmem>>, vector<8x256xbf16>,
    %164 = arith.truncf %147 : vector<8x256xf32> to vector<8x256xbf16>
    %c32_67 = arith.constant 32 : index
    %c0_68 = arith.constant 0 : index
    %165 = vector.load %arg6[%c32_67, %c0_68] : memref<144x256xbf16, #tpu.memory_space<vmem>>, vector<8x256xbf16>
    tpu.vector_store %arg6[%c32_67, %c0_68], %164 {strides = array<i32>} : memref<144x256xbf16, #tpu.memory_space<vmem>>, vector<8x256xbf16>,
    %c255_i32_69 = arith.constant 255 : i32
    %166 = tpu.dynamic_rotate %147 by %c255_i32_69 dim 1 : vector<8x256xf32>, i32 -> vector<8x256xf32>
    %167 = arith.truncf %166 : vector<8x256xf32> to vector<8x256xbf16>
    %168 = arith.mulf %167, %15 : vector<8x256xbf16>
    %c40 = arith.constant 40 : index
    %c0_70 = arith.constant 0 : index
    %169 = vector.load %arg6[%c40, %c0_70] : memref<144x256xbf16, #tpu.memory_space<vmem>>, vector<8x256xbf16>
    tpu.vector_store %arg6[%c40, %c0_70], %168 {strides = array<i32>} : memref<144x256xbf16, #tpu.memory_space<vmem>>, vector<8x256xbf16>,
    %c241_i32_71 = arith.constant 241 : i32
    %170 = tpu.dynamic_rotate %147 by %c241_i32_71 dim 1 : vector<8x256xf32>, i32 -> vector<8x256xf32>
    %171 = arith.truncf %170 : vector<8x256xf32> to vector<8x256xbf16>
    %172 = arith.mulf %171, %18 : vector<8x256xbf16>
    %c48_72 = arith.constant 48 : index
    %c0_73 = arith.constant 0 : index
    %173 = vector.load %arg6[%c48_72, %c0_73] : memref<144x256xbf16, #tpu.memory_space<vmem>>, vector<8x256xbf16>
    tpu.vector_store %arg6[%c48_72, %c0_73], %172 {strides = array<i32>} : memref<144x256xbf16, #tpu.memory_space<vmem>>, vector<8x256xbf16>,
    %c240_i32_74 = arith.constant 240 : i32
    %174 = tpu.dynamic_rotate %147 by %c240_i32_74 dim 1 : vector<8x256xf32>, i32 -> vector<8x256xf32>
    %175 = arith.truncf %174 : vector<8x256xf32> to vector<8x256xbf16>
    %176 = arith.mulf %175, %21 : vector<8x256xbf16>
    %c56 = arith.constant 56 : index
    %c0_75 = arith.constant 0 : index
    %177 = vector.load %arg6[%c56, %c0_75] : memref<144x256xbf16, #tpu.memory_space<vmem>>, vector<8x256xbf16>
    tpu.vector_store %arg6[%c56, %c0_75], %176 {strides = array<i32>} : memref<144x256xbf16, #tpu.memory_space<vmem>>, vector<8x256xbf16>,
    %c239_i32_76 = arith.constant 239 : i32
    %178 = tpu.dynamic_rotate %147 by %c239_i32_76 dim 1 : vector<8x256xf32>, i32 -> vector<8x256xf32>
    %179 = arith.truncf %178 : vector<8x256xf32> to vector<8x256xbf16>
    %180 = arith.mulf %179, %24 : vector<8x256xbf16>
    %c64_77 = arith.constant 64 : index
    %c0_78 = arith.constant 0 : index
    %181 = vector.load %arg6[%c64_77, %c0_78] : memref<144x256xbf16, #tpu.memory_space<vmem>>, vector<8x256xbf16>
    tpu.vector_store %arg6[%c64_77, %c0_78], %180 {strides = array<i32>} : memref<144x256xbf16, #tpu.memory_space<vmem>>, vector<8x256xbf16>,
    %c40_79 = arith.constant 40 : index
    %c0_80 = arith.constant 0 : index
    %182 = vector.load %arg3[%c40_79, %c0_80] : memref<104x144xbf16, #tpu.memory_space<vmem>>, vector<16x72xbf16>
    %c0_81 = arith.constant 0 : index
    %c0_82 = arith.constant 0 : index
    %183 = vector.load %arg6[%c0_81, %c0_82] : memref<144x256xbf16, #tpu.memory_space<vmem>>, vector<72x256xbf16>
    %cst_83 = arith.constant dense<0.000000e+00> : vector<16x256xf32>
    %184 = tpu.matmul %182, %183, %cst_83 {dimension_numbers = #tpu.dot_dimension_numbers<[1], [0], [0], [1], [0, 0, 1, 1], [], []>} : vector<16x72xbf16>, vector<72x256xbf16>, vector<16x256xf32> -> vector<16x256xf32>
    %185 = vector.extract_strided_slice %184 {offsets = [0, 0], sizes = [8, 256], strides = [1, 1]} : vector<16x256xf32> to vector<8x256xf32>
    %c32_84 = arith.constant 32 : index
    %c0_85 = arith.constant 0 : index
    %186 = vector.load %arg4[%c32_84, %c0_85] : memref<64x1xf32, #tpu.memory_space<vmem>>, vector<8x1xf32>
    %187 = vector.broadcast %186 : vector<8x1xf32> to vector<8x256xf32>
    %188 = arith.addf %185, %187 : vector<8x256xf32>
    %cst_86 = arith.constant 0.000000e+00 : f32
    %189 = vector.broadcast %cst_86 : f32 to vector<8x256xf32>
    %190 = arith.subf %189, %188 : vector<8x256xf32>
    %191 = math.exp %190 : vector<8x256xf32>
    %cst_87 = arith.constant 1.000000e+00 : f32
    %192 = vector.broadcast %cst_87 : f32 to vector<8x256xf32>
    %193 = arith.addf %192, %191 : vector<8x256xf32>
    %194 = tpu.reciprocal %193 {approx = true} : vector<8x256xf32> -> vector<8x256xf32>
    %195 = arith.mulf %188, %194 : vector<8x256xf32>
    %c17_i32_88 = arith.constant 17 : i32
    %196 = tpu.dynamic_rotate %195 by %c17_i32_88 dim 1 : vector<8x256xf32>, i32 -> vector<8x256xf32>
    %197 = arith.truncf %196 : vector<8x256xf32> to vector<8x256xbf16>
    %198 = arith.mulf %197, %3 : vector<8x256xbf16>
    %c0_89 = arith.constant 0 : index
    %c0_90 = arith.constant 0 : index
    %199 = vector.load %arg6[%c0_89, %c0_90] : memref<144x256xbf16, #tpu.memory_space<vmem>>, vector<8x256xbf16>
    tpu.vector_store %arg6[%c0_89, %c0_90], %198 {strides = array<i32>} : memref<144x256xbf16, #tpu.memory_space<vmem>>, vector<8x256xbf16>,
    %c16_i32_91 = arith.constant 16 : i32
    %200 = tpu.dynamic_rotate %195 by %c16_i32_91 dim 1 : vector<8x256xf32>, i32 -> vector<8x256xf32>
    %201 = arith.truncf %200 : vector<8x256xf32> to vector<8x256xbf16>
    %202 = arith.mulf %201, %6 : vector<8x256xbf16>
    %c8_92 = arith.constant 8 : index
    %c0_93 = arith.constant 0 : index
    %203 = vector.load %arg6[%c8_92, %c0_93] : memref<144x256xbf16, #tpu.memory_space<vmem>>, vector<8x256xbf16>
    tpu.vector_store %arg6[%c8_92, %c0_93], %202 {strides = array<i32>} : memref<144x256xbf16, #tpu.memory_space<vmem>>, vector<8x256xbf16>,
    %c15_i32_94 = arith.constant 15 : i32
    %204 = tpu.dynamic_rotate %195 by %c15_i32_94 dim 1 : vector<8x256xf32>, i32 -> vector<8x256xf32>
    %205 = arith.truncf %204 : vector<8x256xf32> to vector<8x256xbf16>
    %206 = arith.mulf %205, %9 : vector<8x256xbf16>
    %c16_95 = arith.constant 16 : index
    %c0_96 = arith.constant 0 : index
    %207 = vector.load %arg6[%c16_95, %c0_96] : memref<144x256xbf16, #tpu.memory_space<vmem>>, vector<8x256xbf16>
    tpu.vector_store %arg6[%c16_95, %c0_96], %206 {strides = array<i32>} : memref<144x256xbf16, #tpu.memory_space<vmem>>, vector<8x256xbf16>,
    %c1_i32_97 = arith.constant 1 : i32
    %208 = tpu.dynamic_rotate %195 by %c1_i32_97 dim 1 : vector<8x256xf32>, i32 -> vector<8x256xf32>
    %209 = arith.truncf %208 : vector<8x256xf32> to vector<8x256xbf16>
    %210 = arith.mulf %209, %12 : vector<8x256xbf16>
    %c24_98 = arith.constant 24 : index
    %c0_99 = arith.constant 0 : index
    %211 = vector.load %arg6[%c24_98, %c0_99] : memref<144x256xbf16, #tpu.memory_space<vmem>>, vector<8x256xbf16>
    tpu.vector_store %arg6[%c24_98, %c0_99], %210 {strides = array<i32>} : memref<144x256xbf16, #tpu.memory_space<vmem>>, vector<8x256xbf16>,
    %212 = arith.truncf %195 : vector<8x256xf32> to vector<8x256xbf16>
    %c32_100 = arith.constant 32 : index
    %c0_101 = arith.constant 0 : index
    %213 = vector.load %arg6[%c32_100, %c0_101] : memref<144x256xbf16, #tpu.memory_space<vmem>>, vector<8x256xbf16>
    tpu.vector_store %arg6[%c32_100, %c0_101], %212 {strides = array<i32>} : memref<144x256xbf16, #tpu.memory_space<vmem>>, vector<8x256xbf16>,
    %c255_i32_102 = arith.constant 255 : i32
    %214 = tpu.dynamic_rotate %195 by %c255_i32_102 dim 1 : vector<8x256xf32>, i32 -> vector<8x256xf32>
    %215 = arith.truncf %214 : vector<8x256xf32> to vector<8x256xbf16>
    %216 = arith.mulf %215, %15 : vector<8x256xbf16>
    %c40_103 = arith.constant 40 : index
    %c0_104 = arith.constant 0 : index
    %217 = vector.load %arg6[%c40_103, %c0_104] : memref<144x256xbf16, #tpu.memory_space<vmem>>, vector<8x256xbf16>
    tpu.vector_store %arg6[%c40_103, %c0_104], %216 {strides = array<i32>} : memref<144x256xbf16, #tpu.memory_space<vmem>>, vector<8x256xbf16>,
    %c241_i32_105 = arith.constant 241 : i32
    %218 = tpu.dynamic_rotate %195 by %c241_i32_105 dim 1 : vector<8x256xf32>, i32 -> vector<8x256xf32>
    %219 = arith.truncf %218 : vector<8x256xf32> to vector<8x256xbf16>
    %220 = arith.mulf %219, %18 : vector<8x256xbf16>
    %c48_106 = arith.constant 48 : index
    %c0_107 = arith.constant 0 : index
    %221 = vector.load %arg6[%c48_106, %c0_107] : memref<144x256xbf16, #tpu.memory_space<vmem>>, vector<8x256xbf16>
    tpu.vector_store %arg6[%c48_106, %c0_107], %220 {strides = array<i32>} : memref<144x256xbf16, #tpu.memory_space<vmem>>, vector<8x256xbf16>,
    %c240_i32_108 = arith.constant 240 : i32
    %222 = tpu.dynamic_rotate %195 by %c240_i32_108 dim 1 : vector<8x256xf32>, i32 -> vector<8x256xf32>
    %223 = arith.truncf %222 : vector<8x256xf32> to vector<8x256xbf16>
    %224 = arith.mulf %223, %21 : vector<8x256xbf16>
    %c56_109 = arith.constant 56 : index
    %c0_110 = arith.constant 0 : index
    %225 = vector.load %arg6[%c56_109, %c0_110] : memref<144x256xbf16, #tpu.memory_space<vmem>>, vector<8x256xbf16>
    tpu.vector_store %arg6[%c56_109, %c0_110], %224 {strides = array<i32>} : memref<144x256xbf16, #tpu.memory_space<vmem>>, vector<8x256xbf16>,
    %c239_i32_111 = arith.constant 239 : i32
    %226 = tpu.dynamic_rotate %195 by %c239_i32_111 dim 1 : vector<8x256xf32>, i32 -> vector<8x256xf32>
    %227 = arith.truncf %226 : vector<8x256xf32> to vector<8x256xbf16>
    %228 = arith.mulf %227, %24 : vector<8x256xbf16>
    %c64_112 = arith.constant 64 : index
    %c0_113 = arith.constant 0 : index
    %229 = vector.load %arg6[%c64_112, %c0_113] : memref<144x256xbf16, #tpu.memory_space<vmem>>, vector<8x256xbf16>
    tpu.vector_store %arg6[%c64_112, %c0_113], %228 {strides = array<i32>} : memref<144x256xbf16, #tpu.memory_space<vmem>>, vector<8x256xbf16>,
    %c56_114 = arith.constant 56 : index
    %c0_115 = arith.constant 0 : index
    %230 = vector.load %arg3[%c56_114, %c0_115] : memref<104x144xbf16, #tpu.memory_space<vmem>>, vector<8x72xbf16>
    %c0_116 = arith.constant 0 : index
    %c0_117 = arith.constant 0 : index
    %231 = vector.load %arg6[%c0_116, %c0_117] : memref<144x256xbf16, #tpu.memory_space<vmem>>, vector<72x256xbf16>
    %cst_118 = arith.constant dense<0.000000e+00> : vector<8x256xf32>
    %232 = tpu.matmul %230, %231, %cst_118 {dimension_numbers = #tpu.dot_dimension_numbers<[1], [0], [0], [1], [0, 0, 1, 1], [], []>} : vector<8x72xbf16>, vector<72x256xbf16>, vector<8x256xf32> -> vector<8x256xf32>
    %c40_119 = arith.constant 40 : index
    %c0_120 = arith.constant 0 : index
    %233 = vector.load %arg4[%c40_119, %c0_120] : memref<64x1xf32, #tpu.memory_space<vmem>>, vector<8x1xf32>
    %234 = vector.broadcast %233 : vector<8x1xf32> to vector<8x256xf32>
    %235 = arith.addf %232, %234 : vector<8x256xf32>
    %236 = arith.addf %235, %147 : vector<8x256xf32>
    %cst_121 = arith.constant 0.000000e+00 : f32
    %237 = vector.broadcast %cst_121 : f32 to vector<8x256xf32>
    %238 = arith.subf %237, %236 : vector<8x256xf32>
    %239 = math.exp %238 : vector<8x256xf32>
    %cst_122 = arith.constant 1.000000e+00 : f32
    %240 = vector.broadcast %cst_122 : f32 to vector<8x256xf32>
    %241 = arith.addf %240, %239 : vector<8x256xf32>
    %242 = tpu.reciprocal %241 {approx = true} : vector<8x256xf32> -> vector<8x256xf32>
    %243 = arith.mulf %236, %242 : vector<8x256xf32>
    %244 = vector.extract_strided_slice %184 {offsets = [8, 0], sizes = [8, 256], strides = [1, 1]} : vector<16x256xf32> to vector<8x256xf32>
    %c17_i32_123 = arith.constant 17 : i32
    %245 = tpu.dynamic_rotate %244 by %c17_i32_123 dim 1 : vector<8x256xf32>, i32 -> vector<8x256xf32>
    %246 = arith.truncf %245 : vector<8x256xf32> to vector<8x256xbf16>
    %247 = arith.mulf %246, %3 : vector<8x256xbf16>
    %c0_124 = arith.constant 0 : index
    %c0_125 = arith.constant 0 : index
    %248 = vector.load %arg6[%c0_124, %c0_125] : memref<144x256xbf16, #tpu.memory_space<vmem>>, vector<8x256xbf16>
    tpu.vector_store %arg6[%c0_124, %c0_125], %247 {strides = array<i32>} : memref<144x256xbf16, #tpu.memory_space<vmem>>, vector<8x256xbf16>,
    %c16_i32_126 = arith.constant 16 : i32
    %249 = tpu.dynamic_rotate %244 by %c16_i32_126 dim 1 : vector<8x256xf32>, i32 -> vector<8x256xf32>
    %250 = arith.truncf %249 : vector<8x256xf32> to vector<8x256xbf16>
    %251 = arith.mulf %250, %6 : vector<8x256xbf16>
    %c8_127 = arith.constant 8 : index
    %c0_128 = arith.constant 0 : index
    %252 = vector.load %arg6[%c8_127, %c0_128] : memref<144x256xbf16, #tpu.memory_space<vmem>>, vector<8x256xbf16>
    tpu.vector_store %arg6[%c8_127, %c0_128], %251 {strides = array<i32>} : memref<144x256xbf16, #tpu.memory_space<vmem>>, vector<8x256xbf16>,
    %c15_i32_129 = arith.constant 15 : i32
    %253 = tpu.dynamic_rotate %244 by %c15_i32_129 dim 1 : vector<8x256xf32>, i32 -> vector<8x256xf32>
    %254 = arith.truncf %253 : vector<8x256xf32> to vector<8x256xbf16>
    %255 = arith.mulf %254, %9 : vector<8x256xbf16>
    %c16_130 = arith.constant 16 : index
    %c0_131 = arith.constant 0 : index
    %256 = vector.load %arg6[%c16_130, %c0_131] : memref<144x256xbf16, #tpu.memory_space<vmem>>, vector<8x256xbf16>
    tpu.vector_store %arg6[%c16_130, %c0_131], %255 {strides = array<i32>} : memref<144x256xbf16, #tpu.memory_space<vmem>>, vector<8x256xbf16>,
    %c1_i32_132 = arith.constant 1 : i32
    %257 = tpu.dynamic_rotate %244 by %c1_i32_132 dim 1 : vector<8x256xf32>, i32 -> vector<8x256xf32>
    %258 = arith.truncf %257 : vector<8x256xf32> to vector<8x256xbf16>
    %259 = arith.mulf %258, %12 : vector<8x256xbf16>
    %c24_133 = arith.constant 24 : index
    %c0_134 = arith.constant 0 : index
    %260 = vector.load %arg6[%c24_133, %c0_134] : memref<144x256xbf16, #tpu.memory_space<vmem>>, vector<8x256xbf16>
    tpu.vector_store %arg6[%c24_133, %c0_134], %259 {strides = array<i32>} : memref<144x256xbf16, #tpu.memory_space<vmem>>, vector<8x256xbf16>,
    %261 = arith.truncf %244 : vector<8x256xf32> to vector<8x256xbf16>
    %c32_135 = arith.constant 32 : index
    %c0_136 = arith.constant 0 : index
    %262 = vector.load %arg6[%c32_135, %c0_136] : memref<144x256xbf16, #tpu.memory_space<vmem>>, vector<8x256xbf16>
    tpu.vector_store %arg6[%c32_135, %c0_136], %261 {strides = array<i32>} : memref<144x256xbf16, #tpu.memory_space<vmem>>, vector<8x256xbf16>,
    %c255_i32_137 = arith.constant 255 : i32
    %263 = tpu.dynamic_rotate %244 by %c255_i32_137 dim 1 : vector<8x256xf32>, i32 -> vector<8x256xf32>
    %264 = arith.truncf %263 : vector<8x256xf32> to vector<8x256xbf16>
    %265 = arith.mulf %264, %15 : vector<8x256xbf16>
    %c40_138 = arith.constant 40 : index
    %c0_139 = arith.constant 0 : index
    %266 = vector.load %arg6[%c40_138, %c0_139] : memref<144x256xbf16, #tpu.memory_space<vmem>>, vector<8x256xbf16>
    tpu.vector_store %arg6[%c40_138, %c0_139], %265 {strides = array<i32>} : memref<144x256xbf16, #tpu.memory_space<vmem>>, vector<8x256xbf16>,
    %c241_i32_140 = arith.constant 241 : i32
    %267 = tpu.dynamic_rotate %244 by %c241_i32_140 dim 1 : vector<8x256xf32>, i32 -> vector<8x256xf32>
    %268 = arith.truncf %267 : vector<8x256xf32> to vector<8x256xbf16>
    %269 = arith.mulf %268, %18 : vector<8x256xbf16>
    %c48_141 = arith.constant 48 : index
    %c0_142 = arith.constant 0 : index
    %270 = vector.load %arg6[%c48_141, %c0_142] : memref<144x256xbf16, #tpu.memory_space<vmem>>, vector<8x256xbf16>
    tpu.vector_store %arg6[%c48_141, %c0_142], %269 {strides = array<i32>} : memref<144x256xbf16, #tpu.memory_space<vmem>>, vector<8x256xbf16>,
    %c240_i32_143 = arith.constant 240 : i32
    %271 = tpu.dynamic_rotate %244 by %c240_i32_143 dim 1 : vector<8x256xf32>, i32 -> vector<8x256xf32>
    %272 = arith.truncf %271 : vector<8x256xf32> to vector<8x256xbf16>
    %273 = arith.mulf %272, %21 : vector<8x256xbf16>
    %c56_144 = arith.constant 56 : index
    %c0_145 = arith.constant 0 : index
    %274 = vector.load %arg6[%c56_144, %c0_145] : memref<144x256xbf16, #tpu.memory_space<vmem>>, vector<8x256xbf16>
    tpu.vector_store %arg6[%c56_144, %c0_145], %273 {strides = array<i32>} : memref<144x256xbf16, #tpu.memory_space<vmem>>, vector<8x256xbf16>,
    %c239_i32_146 = arith.constant 239 : i32
    %275 = tpu.dynamic_rotate %244 by %c239_i32_146 dim 1 : vector<8x256xf32>, i32 -> vector<8x256xf32>
    %276 = arith.truncf %275 : vector<8x256xf32> to vector<8x256xbf16>
    %277 = arith.mulf %276, %24 : vector<8x256xbf16>
    %c64_147 = arith.constant 64 : index
    %c0_148 = arith.constant 0 : index
    %278 = vector.load %arg6[%c64_147, %c0_148] : memref<144x256xbf16, #tpu.memory_space<vmem>>, vector<8x256xbf16>
    tpu.vector_store %arg6[%c64_147, %c0_148], %277 {strides = array<i32>} : memref<144x256xbf16, #tpu.memory_space<vmem>>, vector<8x256xbf16>,
    %c64_149 = arith.constant 64 : index
    %c0_150 = arith.constant 0 : index
    %279 = vector.load %arg3[%c64_149, %c0_150] : memref<104x144xbf16, #tpu.memory_space<vmem>>, vector<8x72xbf16>
    %c0_151 = arith.constant 0 : index
    %c0_152 = arith.constant 0 : index
    %280 = vector.load %arg6[%c0_151, %c0_152] : memref<144x256xbf16, #tpu.memory_space<vmem>>, vector<72x256xbf16>
    %cst_153 = arith.constant dense<0.000000e+00> : vector<8x256xf32>
    %281 = tpu.matmul %279, %280, %cst_153 {dimension_numbers = #tpu.dot_dimension_numbers<[1], [0], [0], [1], [0, 0, 1, 1], [], []>} : vector<8x72xbf16>, vector<72x256xbf16>, vector<8x256xf32> -> vector<8x256xf32>
    %c48_154 = arith.constant 48 : index
    %c0_155 = arith.constant 0 : index
    %282 = vector.load %arg4[%c48_154, %c0_155] : memref<64x1xf32, #tpu.memory_space<vmem>>, vector<8x1xf32>
    %283 = vector.broadcast %282 : vector<8x1xf32> to vector<8x256xf32>
    %284 = arith.addf %281, %283 : vector<8x256xf32>
    %cst_156 = arith.constant 0.000000e+00 : f32
    %285 = vector.broadcast %cst_156 : f32 to vector<8x256xf32>
    %286 = arith.subf %285, %284 : vector<8x256xf32>
    %287 = math.exp %286 : vector<8x256xf32>
    %cst_157 = arith.constant 1.000000e+00 : f32
    %288 = vector.broadcast %cst_157 : f32 to vector<8x256xf32>
    %289 = arith.addf %288, %287 : vector<8x256xf32>
    %290 = tpu.reciprocal %289 {approx = true} : vector<8x256xf32> -> vector<8x256xf32>
    %291 = arith.mulf %284, %290 : vector<8x256xf32>
    %c17_i32_158 = arith.constant 17 : i32
    %292 = tpu.dynamic_rotate %291 by %c17_i32_158 dim 1 : vector<8x256xf32>, i32 -> vector<8x256xf32>
    %293 = arith.truncf %292 : vector<8x256xf32> to vector<8x256xbf16>
    %294 = arith.mulf %293, %3 : vector<8x256xbf16>
    %c0_159 = arith.constant 0 : index
    %c0_160 = arith.constant 0 : index
    %295 = vector.load %arg6[%c0_159, %c0_160] : memref<144x256xbf16, #tpu.memory_space<vmem>>, vector<8x256xbf16>
    tpu.vector_store %arg6[%c0_159, %c0_160], %294 {strides = array<i32>} : memref<144x256xbf16, #tpu.memory_space<vmem>>, vector<8x256xbf16>,
    %c16_i32_161 = arith.constant 16 : i32
    %296 = tpu.dynamic_rotate %291 by %c16_i32_161 dim 1 : vector<8x256xf32>, i32 -> vector<8x256xf32>
    %297 = arith.truncf %296 : vector<8x256xf32> to vector<8x256xbf16>
    %298 = arith.mulf %297, %6 : vector<8x256xbf16>
    %c8_162 = arith.constant 8 : index
    %c0_163 = arith.constant 0 : index
    %299 = vector.load %arg6[%c8_162, %c0_163] : memref<144x256xbf16, #tpu.memory_space<vmem>>, vector<8x256xbf16>
    tpu.vector_store %arg6[%c8_162, %c0_163], %298 {strides = array<i32>} : memref<144x256xbf16, #tpu.memory_space<vmem>>, vector<8x256xbf16>,
    %c15_i32_164 = arith.constant 15 : i32
    %300 = tpu.dynamic_rotate %291 by %c15_i32_164 dim 1 : vector<8x256xf32>, i32 -> vector<8x256xf32>
    %301 = arith.truncf %300 : vector<8x256xf32> to vector<8x256xbf16>
    %302 = arith.mulf %301, %9 : vector<8x256xbf16>
    %c16_165 = arith.constant 16 : index
    %c0_166 = arith.constant 0 : index
    %303 = vector.load %arg6[%c16_165, %c0_166] : memref<144x256xbf16, #tpu.memory_space<vmem>>, vector<8x256xbf16>
    tpu.vector_store %arg6[%c16_165, %c0_166], %302 {strides = array<i32>} : memref<144x256xbf16, #tpu.memory_space<vmem>>, vector<8x256xbf16>,
    %c1_i32_167 = arith.constant 1 : i32
    %304 = tpu.dynamic_rotate %291 by %c1_i32_167 dim 1 : vector<8x256xf32>, i32 -> vector<8x256xf32>
    %305 = arith.truncf %304 : vector<8x256xf32> to vector<8x256xbf16>
    %306 = arith.mulf %305, %12 : vector<8x256xbf16>
    %c24_168 = arith.constant 24 : index
    %c0_169 = arith.constant 0 : index
    %307 = vector.load %arg6[%c24_168, %c0_169] : memref<144x256xbf16, #tpu.memory_space<vmem>>, vector<8x256xbf16>
    tpu.vector_store %arg6[%c24_168, %c0_169], %306 {strides = array<i32>} : memref<144x256xbf16, #tpu.memory_space<vmem>>, vector<8x256xbf16>,
    %308 = arith.truncf %291 : vector<8x256xf32> to vector<8x256xbf16>
    %c32_170 = arith.constant 32 : index
    %c0_171 = arith.constant 0 : index
    %309 = vector.load %arg6[%c32_170, %c0_171] : memref<144x256xbf16, #tpu.memory_space<vmem>>, vector<8x256xbf16>
    tpu.vector_store %arg6[%c32_170, %c0_171], %308 {strides = array<i32>} : memref<144x256xbf16, #tpu.memory_space<vmem>>, vector<8x256xbf16>,
    %c255_i32_172 = arith.constant 255 : i32
    %310 = tpu.dynamic_rotate %291 by %c255_i32_172 dim 1 : vector<8x256xf32>, i32 -> vector<8x256xf32>
    %311 = arith.truncf %310 : vector<8x256xf32> to vector<8x256xbf16>
    %312 = arith.mulf %311, %15 : vector<8x256xbf16>
    %c40_173 = arith.constant 40 : index
    %c0_174 = arith.constant 0 : index
    %313 = vector.load %arg6[%c40_173, %c0_174] : memref<144x256xbf16, #tpu.memory_space<vmem>>, vector<8x256xbf16>
    tpu.vector_store %arg6[%c40_173, %c0_174], %312 {strides = array<i32>} : memref<144x256xbf16, #tpu.memory_space<vmem>>, vector<8x256xbf16>,
    %c241_i32_175 = arith.constant 241 : i32
    %314 = tpu.dynamic_rotate %291 by %c241_i32_175 dim 1 : vector<8x256xf32>, i32 -> vector<8x256xf32>
    %315 = arith.truncf %314 : vector<8x256xf32> to vector<8x256xbf16>
    %316 = arith.mulf %315, %18 : vector<8x256xbf16>
    %c48_176 = arith.constant 48 : index
    %c0_177 = arith.constant 0 : index
    %317 = vector.load %arg6[%c48_176, %c0_177] : memref<144x256xbf16, #tpu.memory_space<vmem>>, vector<8x256xbf16>
    tpu.vector_store %arg6[%c48_176, %c0_177], %316 {strides = array<i32>} : memref<144x256xbf16, #tpu.memory_space<vmem>>, vector<8x256xbf16>,
    %c240_i32_178 = arith.constant 240 : i32
    %318 = tpu.dynamic_rotate %291 by %c240_i32_178 dim 1 : vector<8x256xf32>, i32 -> vector<8x256xf32>
    %319 = arith.truncf %318 : vector<8x256xf32> to vector<8x256xbf16>
    %320 = arith.mulf %319, %21 : vector<8x256xbf16>
    %c56_179 = arith.constant 56 : index
    %c0_180 = arith.constant 0 : index
    %321 = vector.load %arg6[%c56_179, %c0_180] : memref<144x256xbf16, #tpu.memory_space<vmem>>, vector<8x256xbf16>
    tpu.vector_store %arg6[%c56_179, %c0_180], %320 {strides = array<i32>} : memref<144x256xbf16, #tpu.memory_space<vmem>>, vector<8x256xbf16>,
    %c239_i32_181 = arith.constant 239 : i32
    %322 = tpu.dynamic_rotate %291 by %c239_i32_181 dim 1 : vector<8x256xf32>, i32 -> vector<8x256xf32>
    %323 = arith.truncf %322 : vector<8x256xf32> to vector<8x256xbf16>
    %324 = arith.mulf %323, %24 : vector<8x256xbf16>
    %c64_182 = arith.constant 64 : index
    %c0_183 = arith.constant 0 : index
    %325 = vector.load %arg6[%c64_182, %c0_183] : memref<144x256xbf16, #tpu.memory_space<vmem>>, vector<8x256xbf16>
    tpu.vector_store %arg6[%c64_182, %c0_183], %324 {strides = array<i32>} : memref<144x256xbf16, #tpu.memory_space<vmem>>, vector<8x256xbf16>,
    %c72 = arith.constant 72 : index
    %c0_184 = arith.constant 0 : index
    %326 = vector.load %arg3[%c72, %c0_184] : memref<104x144xbf16, #tpu.memory_space<vmem>>, vector<8x72xbf16>
    %c0_185 = arith.constant 0 : index
    %c0_186 = arith.constant 0 : index
    %327 = vector.load %arg6[%c0_185, %c0_186] : memref<144x256xbf16, #tpu.memory_space<vmem>>, vector<72x256xbf16>
    %cst_187 = arith.constant dense<0.000000e+00> : vector<8x256xf32>
    %328 = tpu.matmul %326, %327, %cst_187 {dimension_numbers = #tpu.dot_dimension_numbers<[1], [0], [0], [1], [0, 0, 1, 1], [], []>} : vector<8x72xbf16>, vector<72x256xbf16>, vector<8x256xf32> -> vector<8x256xf32>
    %c56_188 = arith.constant 56 : index
    %c0_189 = arith.constant 0 : index
    %329 = vector.load %arg4[%c56_188, %c0_189] : memref<64x1xf32, #tpu.memory_space<vmem>>, vector<8x1xf32>
    %330 = vector.broadcast %329 : vector<8x1xf32> to vector<8x256xf32>
    %331 = arith.addf %328, %330 : vector<8x256xf32>
    %332 = arith.addf %331, %244 : vector<8x256xf32>
    %cst_190 = arith.constant 0.000000e+00 : f32
    %333 = vector.broadcast %cst_190 : f32 to vector<8x256xf32>
    %334 = arith.subf %333, %332 : vector<8x256xf32>
    %335 = math.exp %334 : vector<8x256xf32>
    %cst_191 = arith.constant 1.000000e+00 : f32
    %336 = vector.broadcast %cst_191 : f32 to vector<8x256xf32>
    %337 = arith.addf %336, %335 : vector<8x256xf32>
    %338 = tpu.reciprocal %337 {approx = true} : vector<8x256xf32> -> vector<8x256xf32>
    %339 = arith.mulf %332, %338 : vector<8x256xf32>
    %c96_192 = arith.constant 96 : index
    %c0_193 = arith.constant 0 : index
    %340 = vector.load %arg3[%c96_192, %c0_193] : memref<104x144xbf16, #tpu.memory_space<vmem>>, vector<8x8xbf16>
    %341 = arith.truncf %339 : vector<8x256xf32> to vector<8x256xbf16>
    %cst_194 = arith.constant dense<0.000000e+00> : vector<8x256xf32>
    %342 = tpu.matmul %340, %341, %cst_194 {dimension_numbers = #tpu.dot_dimension_numbers<[1], [0], [0], [1], [0, 0, 1, 1], [], []>} : vector<8x8xbf16>, vector<8x256xbf16>, vector<8x256xf32> -> vector<8x256xf32>
    %343 = arith.addf %243, %342 : vector<8x256xf32>
    %c80_195 = arith.constant 80 : index
    %c0_196 = arith.constant 0 : index
    %344 = vector.load %arg3[%c80_195, %c0_196] : memref<104x144xbf16, #tpu.memory_space<vmem>>, vector<16x8xbf16>
    %345 = arith.truncf %343 : vector<8x256xf32> to vector<8x256xbf16>
    %cst_197 = arith.constant dense<0.000000e+00> : vector<16x256xf32>
    %346 = tpu.matmul %344, %345, %cst_197 {dimension_numbers = #tpu.dot_dimension_numbers<[1], [0], [0], [1], [0, 0, 1, 1], [], []>} : vector<16x8xbf16>, vector<8x256xbf16>, vector<16x256xf32> -> vector<16x256xf32>
    %347 = arith.addf %146, %346 : vector<16x256xf32>
    %c0_198 = arith.constant 0 : index
    %c0_199 = arith.constant 0 : index
    %c0_200 = arith.constant 0 : index
    %348 = vector.load %arg5[%c0_198, %c0_199, %c0_200] : memref<1x16x256xf32, #tpu.memory_space<vmem>>, vector<1x16x256xf32>
    %349 = vector.shape_cast %348 : vector<1x16x256xf32> to vector<16x256xf32>
    %350 = vector.shape_cast %347 : vector<16x256xf32> to vector<1x16x256xf32>
    tpu.vector_store %arg5[%c0_198, %c0_199, %c0_200], %350 {strides = array<i32>} : memref<1x16x256xf32, #tpu.memory_space<vmem>>, vector<1x16x256xf32>,
    return
  }
  func.func @transform_0(%arg0: i32) -> (i32, i32, i32) {
    %c0_i32 = arith.constant 0 : i32
    %c0_i32_0 = arith.constant 0 : i32
    %c0_i32_1 = arith.constant 0 : i32
    return %arg0, %c0_i32, %c0_i32_0 : i32, i32, i32
  }
  func.func @transform_1(%arg0: i32) -> (i32, i32) {
    %c0_i32 = arith.constant 0 : i32
    %c0_i32_0 = arith.constant 0 : i32
    %c0_i32_1 = arith.constant 0 : i32
    return %c0_i32, %c0_i32_0 : i32, i32
  }
  func.func @transform_2(%arg0: i32) -> (i32, i32) {
    %c0_i32 = arith.constant 0 : i32
    %c0_i32_0 = arith.constant 0 : i32
    %c0_i32_1 = arith.constant 0 : i32
    return %c0_i32, %c0_i32_0 : i32, i32
  }
  func.func @transform_3(%arg0: i32) -> (i32, i32) {
    %c0_i32 = arith.constant 0 : i32
    %c0_i32_0 = arith.constant 0 : i32
    %c0_i32_1 = arith.constant 0 : i32
    return %c0_i32, %c0_i32_0 : i32, i32
  }
  func.func @transform_4(%arg0: i32) -> (i32, i32, i32) {
    %c0_i32 = arith.constant 0 : i32
    %c0_i32_0 = arith.constant 0 : i32
    %c0_i32_1 = arith.constant 0 : i32
    return %arg0, %c0_i32, %c0_i32_0 : i32, i32, i32
  }
}

</mosaic_0001>

<llo_original>
// kernel: fractal_block_forward.1
$region0: #{fractal_block_forward.1}
  #allocation0 [shape = 'u32[]', space=smem, size = 0x4, offset = 0x4, fixed_abs, tag = 'smem constant byte address 0x4 - core index']
  #allocation1 [shape = 'u32[144,128]{1,0:T(1,128)}', space=vmem, size = 0x12000, scoped, tag = 'internal scratch']
  #allocation2 [shape = 'bf16[144,256]{1,0:T(16,128)(2,1)}', space=vmem, size = 0x12000, scoped, tag = 'scratch operand']
  %s0 = inlined_call_operand.vmem [shape: f32[2,16,256], index: 0, kind: input, shape index: {}]
  %s1 = inlined_call_operand.vmem [shape: bf16[9,256], index: 1, kind: input, shape index: {}]
  %s2 = inlined_call_operand.vmem [shape: bf16[104,144], index: 2, kind: input, shape index: {}]
  %s3 = inlined_call_operand.vmem [shape: f32[64,1], index: 3, kind: input, shape index: {}]
  %s4 = inlined_call_operand.vmem [shape: f32[2,16,256], index: 4, kind: output, shape index: {}]
  %s5 = sld [smem:[#allocation0]]
  $region49: #{fractal_block_forward.1} parent=0
    _
  %s7 = ssub.s32 1, %s5
  %s8 = scalar_select 0, %s7, %s5
  loop: start=0, step=1, limit=4
  $region2: #{fractal_block_forward.1} parent=0 // loop_pre_header
    _
  $region3: #{fractal_block_forward.1} parent=0 // loop_header
    %s10 = sphi 0, %s14
    %p11 = scmp.ge.s32.totalorder %s10, 4
    %s20 = sphi 0, %s22
    %s23 = sphi 0, %s20
    %s24 = sphi 0, %s23
    %s40 = sphi 0, %s24
    %s44 = sphi 0, %s44
    %s46 = sphi 0, %s44
    %s47 = sphi 0, %s46
    %s61 = sphi 0, %s47
    %s65 = sphi 0, %s65
    %s67 = sphi 0, %s65
    %s68 = sphi 0, %s67
    %s82 = sphi 0, %s68
    %s86 = sphi 0, %s86
    %s88 = sphi 0, %s86
    %s89 = sphi 0, %s88
    %s103 = sphi 0, %s89
    %s109 = sphi 0, %s111
    %s112 = sphi 0, %s109
    %s113 = sphi 0, %s112
    %s129 = sphi 0, %s113
  $region4: #{fractal_block_forward.1} parent=0 // loop_header_branch
    %13 = sbr.rel (%p11) target = $region8
  $region5: #{fractal_block_forward.1} parent=0 // loop_body
    %s15 = ssub.s32 %s10, 1
    %s16 = ssub.s32 %s10, 2
    %s17 = sadd.s32 %s10, 1
    %s18 = ssub.s32 %s10, %s17
    %p19 = scmp.eq.s32.totalorder %s18, 0
    %s21 = sadd.s32 %s20, 1
    %s22 = scalar_select %p19, %s20, %s21
    %p25 = pneg %p19
    %p26 = scmp.eq.s32.totalorder %s10, 1
    %p27 = por %p25, %p26
    %p28 = scmp.ne.s32.totalorder %s20, %s23
    %p29 = scmp.eq.s32.totalorder %s10, 0
    %p30 = por %p28, %p29
    %p31 = scmp.ne.s32.totalorder %s20, %s23
    %p32 = scmp.eq.s32.totalorder %s15, 1
    %p33 = por %p31, %p32
    %p34 = scmp.ne.s32.totalorder %s23, %s24
    %p35 = scmp.eq.s32.totalorder %s15, 0
    %p36 = por %p34, %p35
    %p37 = scmp.ne.s32.totalorder %s23, %s24
    %p38 = scmp.eq.s32.totalorder %s16, 1
    %p39 = por %p37, %p38
    %p41 = scmp.ne.s32.totalorder %s24, %s40
    %p42 = scmp.eq.s32.totalorder %s16, 0
    %p43 = por %p41, %p42
    %s45 = sadd.s32 %s44, 1
    %p48 = scmp.eq.s32.totalorder %s10, 1
    %p49 = scmp.ne.s32.totalorder %s44, %s46
    %p50 = scmp.eq.s32.totalorder %s10, 0
    %p51 = por %p49, %p50
    %p52 = scmp.ne.s32.totalorder %s44, %s46
    %p53 = scmp.eq.s32.totalorder %s15, 1
    %p54 = por %p52, %p53
    %p55 = scmp.ne.s32.totalorder %s46, %s47
    %p56 = scmp.eq.s32.totalorder %s15, 0
    %p57 = por %p55, %p56
    %p58 = scmp.ne.s32.totalorder %s46, %s47
    %p59 = scmp.eq.s32.totalorder %s16, 1
    %p60 = por %p58, %p59
    %p62 = scmp.ne.s32.totalorder %s47, %s61
    %p63 = scmp.eq.s32.totalorder %s16, 0
    %p64 = por %p62, %p63
    %s66 = sadd.s32 %s65, 1
    %p69 = scmp.eq.s32.totalorder %s10, 1
    %p70 = scmp.ne.s32.totalorder %s65, %s67
    %p71 = scmp.eq.s32.totalorder %s10, 0
    %p72 = por %p70, %p71
    %p73 = scmp.ne.s32.totalorder %s65, %s67
    %p74 = scmp.eq.s32.totalorder %s15, 1
    %p75 = por %p73, %p74
    %p76 = scmp.ne.s32.totalorder %s67, %s68
    %p77 = scmp.eq.s32.totalorder %s15, 0
    %p78 = por %p76, %p77
    %p79 = scmp.ne.s32.totalorder %s67, %s68
    %p80 = scmp.eq.s32.totalorder %s16, 1
    %p81 = por %p79, %p80
    %p83 = scmp.ne.s32.totalorder %s68, %s82
    %p84 = scmp.eq.s32.totalorder %s16, 0
    %p85 = por %p83, %p84
    %s87 = sadd.s32 %s86, 1
    %p90 = scmp.eq.s32.totalorder %s10, 1
    %p91 = scmp.ne.s32.totalorder %s86, %s88
    %p92 = scmp.eq.s32.totalorder %s10, 0
    %p93 = por %p91, %p92
    %p94 = scmp.ne.s32.totalorder %s86, %s88
    %p95 = scmp.eq.s32.totalorder %s15, 1
    %p96 = por %p94, %p95
    %p97 = scmp.ne.s32.totalorder %s88, %s89
    %p98 = scmp.eq.s32.totalorder %s15, 0
    %p99 = por %p97, %p98
    %p100 = scmp.ne.s32.totalorder %s88, %s89
    %p101 = scmp.eq.s32.totalorder %s16, 1
    %p102 = por %p100, %p101
    %p104 = scmp.ne.s32.totalorder %s89, %s103
    %p105 = scmp.eq.s32.totalorder %s16, 0
    %p106 = por %p104, %p105
    %s107 = ssub.s32 %s10, %s17
    %p108 = scmp.eq.s32.totalorder %s107, 0
    %s110 = sadd.s32 %s109, 1
    %s111 = scalar_select %p108, %s109, %s110
    %p114 = pneg %p108
    %p115 = scmp.eq.s32.totalorder %s10, 1
    %p116 = por %p114, %p115
    %p117 = scmp.ne.s32.totalorder %s109, %s112
    %p118 = scmp.eq.s32.totalorder %s10, 0
    %p119 = por %p117, %p118
    %p120 = scmp.ne.s32.totalorder %s109, %s112
    %p121 = scmp.eq.s32.totalorder %s15, 1
    %p122 = por %p120, %p121
    %p123 = scmp.ne.s32.totalorder %s112, %s113
    %p124 = scmp.eq.s32.totalorder %s15, 0
    %p125 = por %p123, %p124
    %p126 = scmp.ne.s32.totalorder %s112, %s113
    %p127 = scmp.eq.s32.totalorder %s16, 1
    %p128 = por %p126, %p127
    %p130 = scmp.ne.s32.totalorder %s113, %s129
    %p131 = scmp.eq.s32.totalorder %s16, 0
    %p132 = por %p130, %p131
    %p133 = scmp.le.s32.totalorder 1, %s10
    %p134 = scmp.lt.s32.totalorder %s10, 3
    %p135 = pnand %p133, %p134
    %p136 = pneg %p135
    // Predicated region
    $region9: #{fractal_block_forward.1} parent=5 // pred_check
      _
    $region10: #{fractal_block_forward.1} parent=5 // pred_check_branch
      %138 = sbr.rel (%p135) target = $region12
    $region11: #{fractal_block_forward.1} parent=5 // pred_region
      %s139 = ssub.s32 %s10, 1
      // Predicated region
      $region13: #{fractal_block_forward.1} parent=11 // pred_check
        %p140 = pneg %p57
      $region14: #{fractal_block_forward.1} parent=11 // pred_check_branch
        %142 = sbr.rel (%p140) target = $region16
      $region15: #{fractal_block_forward.1} parent=11 // pred_region
        _
      $region16: #{fractal_block_forward.1} parent=11 // pred_fallthru
        _
      // Predicated region
      $region17: #{fractal_block_forward.1} parent=11 // pred_check
        %p143 = pneg %p78
      $region18: #{fractal_block_forward.1} parent=11 // pred_check_branch
        %145 = sbr.rel (%p143) target = $region20
      $region19: #{fractal_block_forward.1} parent=11 // pred_region
        _
      $region20: #{fractal_block_forward.1} parent=11 // pred_fallthru
        _
      // Predicated region
      $region21: #{fractal_block_forward.1} parent=11 // pred_check
        %p146 = pneg %p99
      $region22: #{fractal_block_forward.1} parent=11 // pred_check_branch
        %148 = sbr.rel (%p146) target = $region24
      $region23: #{fractal_block_forward.1} parent=11 // pred_region
        _
      $region24: #{fractal_block_forward.1} parent=11 // pred_fallthru
        _
    $region12: #{fractal_block_forward.1} parent=5 // pred_fallthru
      _
    %p149 = scmp.lt.s32.totalorder %s10, 2
    // Predicated region
    $region25: #{fractal_block_forward.1} parent=5 // pred_check
      %p150 = pneg %p149
    $region26: #{fractal_block_forward.1} parent=5 // pred_check_branch
      %152 = sbr.rel (%p150) target = $region28
    $region27: #{fractal_block_forward.1} parent=5 // pred_region
      // Predicated region
      $region29: #{fractal_block_forward.1} parent=27 // pred_check
        %p153 = pneg %p30
      $region30: #{fractal_block_forward.1} parent=27 // pred_check_branch
        %155 = sbr.rel (%p153) target = $region32
      $region31: #{fractal_block_forward.1} parent=27 // pred_region
        %p156 = scmp.lt.s32.totalorder %s10, 1
        %s157 = scalar_select %p156, %s10, 1
        %s158 = smul.addr %s157, 4
        %s159 = smul.addr %s158, 8
        %s160 = scalar_lea.vmem %s0, %s159
      $region32: #{fractal_block_forward.1} parent=27 // pred_fallthru
        _
    $region28: #{fractal_block_forward.1} parent=5 // pred_fallthru
      _
    %p161 = scmp.le.s32.totalorder 1, %s10
    %p162 = scmp.lt.s32.totalorder %s10, 3
    %p163 = pnand %p161, %p162
    %p164 = pneg %p163
    // Predicated region
    $region33: #{fractal_block_forward.1} parent=5 // pred_check
      _
    $region34: #{fractal_block_forward.1} parent=5 // pred_check_branch
      %166 = sbr.rel (%p163) target = $region36
    $region35: #{fractal_block_forward.1} parent=5 // pred_region
      %s167 = ssub.s32 %s10, 1
      %p168 = scmp.lt.s32.totalorder %s15, 1
      %s169 = scalar_select %p168, %s15, 1
      %s170 = smul.addr %s169, 4
      %s171 = smul.addr %s170, 8
      %s172 = scalar_lea.vmem %s0, %s171
      %p173 = pneg %p36
      %p174 = pneg %p33
      %p175 = pneg %p57
      %p176 = pneg %p54
      %p177 = pneg %p78
      %p178 = pneg %p75
      %p179 = pneg %p99
      %p180 = pneg %p96
      %p181 = pneg %p125
      %p182 = pneg %p122
      %p183 = scmp.lt.s32.totalorder %s15, 1
      %s184 = scalar_select %p183, %s15, 1
      %s185 = smul.addr %s184, 4
      %s186 = smul.addr %s185, 8
      %s187 = scalar_lea.vmem %s4, %s186
      %p188 = scmp.lt.s32.totalorder %s15, 1
      %s189 = scalar_select %p188, %s15, 1
      %s190 = smul.addr %s189, 4
      %s191 = smul.addr %s190, 8
      %s192 = scalar_lea.vmem %s0, %s191
      %p193 = scmp.lt.s32.totalorder %s15, 1
      %s194 = scalar_select %p193, %s15, 1
      %s195 = smul.addr %s194, 4
      %s196 = smul.addr %s195, 8
      %s197 = scalar_lea.vmem %s4, %s196
      %v199 = vld [vmem:[%s1] sm:$0xff]
      %v200 = vld [vmem:[%s1 + $0x8] sm:$0x11]
      %v202 = vunpack.c.l.b16 %v199
      %v203 = vunpack.c.h.b16 %v199
      %v204 = vpack.c.b16 %v202, %v202
      %v205 = vpack.c.b16 %v203, %v203
      %v207 = vpack.i.b16 %v204, %v204
      %v209 = vlaneseq
      %v210 = vshrl.u32 %v209, 7
      %v211 = vsub.s32 0, %v210
      %v212 = vrot.slane %v207, %v211
      %v214 = vpack.i.b16 %v205, %v205
      %v216 = vlaneseq
      %v217 = vshrl.u32 %v216, 7
      %v218 = vsub.s32 0, %v217
      %v219 = vrot.slane %v214, %v218
      %v220 = vshrl.u32 %v204, 16
      %v221 = vpack.i.b16 %v220, %v220
      %v223 = vlaneseq
      %v224 = vshrl.u32 %v223, 7
      %v225 = vsub.s32 0, %v224
      %v226 = vrot.slane %v221, %v225
      %v227 = vshrl.u32 %v205, 16
      %v228 = vpack.i.b16 %v227, %v227
      %v230 = vlaneseq
      %v231 = vshrl.u32 %v230, 7
      %v232 = vsub.s32 0, %v231
      %v233 = vrot.slane %v228, %v232
      %v234 = vlaneseq
      %v235 = vshrl.u32 %v234, 7
      %v236 = vsub.s32 1, %v235
      %v237 = vrot.slane %v207, %v236
      %v238 = vlaneseq
      %v239 = vshrl.u32 %v238, 7
      %v240 = vsub.s32 1, %v239
      %v241 = vrot.slane %v214, %v240
      %v242 = vlaneseq
      %v243 = vshrl.u32 %v242, 7
      %v244 = vsub.s32 1, %v243
      %v245 = vrot.slane %v221, %v244
      %v246 = vlaneseq
      %v247 = vshrl.u32 %v246, 7
      %v248 = vsub.s32 1, %v247
      %v249 = vrot.slane %v228, %v248
      %v250 = vlaneseq
      %v251 = vshrl.u32 %v250, 7
      %v252 = vsub.s32 2, %v251
      %v253 = vrot.slane %v221, %v252
      %v254 = vlaneseq
      %v255 = vshrl.u32 %v254, 7
      %v256 = vsub.s32 2, %v255
      %v257 = vrot.slane %v228, %v256
      %v258 = vlaneseq
      %v259 = vshrl.u32 %v258, 7
      %v260 = vsub.s32 3, %v259
      %v261 = vrot.slane %v207, %v260
      %v262 = vlaneseq
      %v263 = vshrl.u32 %v262, 7
      %v264 = vsub.s32 3, %v263
      %v265 = vrot.slane %v214, %v264
      %v266 = vlaneseq
      %v267 = vshrl.u32 %v266, 7
      %v268 = vsub.s32 3, %v267
      %v269 = vrot.slane %v221, %v268
      %v270 = vlaneseq
      %v271 = vshrl.u32 %v270, 7
      %v272 = vsub.s32 3, %v271
      %v273 = vrot.slane %v228, %v272
      %v275 = vunpack.c.l.b16 %v200
      %v276 = vunpack.c.h.b16 %v200
      %v277 = vpack.c.b16 %v275, %v275
      %v278 = vpack.c.b16 %v276, %v276
      %v280 = vpack.i.b16 %v277, %v277
      %v282 = vlaneseq
      %v283 = vshrl.u32 %v282, 7
      %v284 = vsub.s32 0, %v283
      %v285 = vrot.slane %v280, %v284
      %v287 = vpack.i.b16 %v278, %v278
      %v289 = vlaneseq
      %v290 = vshrl.u32 %v289, 7
      %v291 = vsub.s32 0, %v290
      %v292 = vrot.slane %v287, %v291
      %v293 = vld [vmem:[%s192] sm:$0xff]
      %v294 = vld [vmem:[%s192 + $0x8] sm:$0xff]
      %v295 = vld [vmem:[%s192 + $0x10] sm:$0xff]
      %v296 = vld [vmem:[%s192 + $0x18] sm:$0xff]
      %297 = vrot.lane.b32.xlu0 %v293, 17
      %v298 = vpop.permute.xlu0 %297
      %299 = vrot.lane.b32.xlu0 %v295, 17
      %v300 = vpop.permute.xlu0 %299
      %301 = vrot.lane.b32.xlu0 %v294, 17
      %v302 = vpop.permute.xlu0 %301
      %303 = vrot.lane.b32.xlu0 %v296, 17
      %v304 = vpop.permute.xlu0 %303
      %v305 = vlaneseq
      %v306 = vand.u32 %v305, 127
      %vm307 = vcmp.lt.s32.totalorder %v306, 17
      %v308 = vsel %vm307, %v298, %v302
      %v309 = vsel %vm307, %v300, %v304
      %v310 = vsel %vm307, %v302, %v298
      %v311 = vsel %vm307, %v304, %v300
      %v312 = vpack.c.bf16 %v311, %v310
      %v313 = vpack.c.bf16 %v309, %v308
      %v314 = vmul.bf16 %v312, %v212
      %v315 = vmul.bf16 %v313, %v219
      %316 = vst [vmem:[#allocation2] sm:$0xff] %v314
      %317 = vst [vmem:[#allocation2 + $0x8] sm:$0xff] %v315
      %318 = vrot.lane.b32.xlu0 %v293, 16
      %v319 = vpop.permute.xlu0 %318
      %320 = vrot.lane.b32.xlu0 %v295, 16
      %v321 = vpop.permute.xlu0 %320
      %322 = vrot.lane.b32.xlu0 %v294, 16
      %v323 = vpop.permute.xlu0 %322
      %324 = vrot.lane.b32.xlu0 %v296, 16
      %v325 = vpop.permute.xlu0 %324
      %vm326 = vcmp.lt.s32.totalorder %v306, 16
      %v327 = vsel %vm326, %v319, %v323
      %v328 = vsel %vm326, %v321, %v325
      %v329 = vsel %vm326, %v323, %v319
      %v330 = vsel %vm326, %v325, %v321
      %v331 = vpack.c.bf16 %v330, %v329
      %v332 = vpack.c.bf16 %v328, %v327
      %v333 = vmul.bf16 %v331, %v226
      %v334 = vmul.bf16 %v332, %v233
      %335 = vst [vmem:[#allocation2 + $0x10] sm:$0xff] %v333
      %336 = vst [vmem:[#allocation2 + $0x18] sm:$0xff] %v334
      %337 = vrot.lane.b32.xlu0 %v293, 15
      %v338 = vpop.permute.xlu0 %337
      %339 = vrot.lane.b32.xlu0 %v295, 15
      %v340 = vpop.permute.xlu0 %339
      %341 = vrot.lane.b32.xlu0 %v294, 15
      %v342 = vpop.permute.xlu0 %341
      %343 = vrot.lane.b32.xlu0 %v296, 15
      %v344 = vpop.permute.xlu0 %343
      %vm345 = vcmp.lt.s32.totalorder %v306, 15
      %v346 = vsel %vm345, %v338, %v342
      %v347 = vsel %vm345, %v340, %v344
      %v348 = vsel %vm345, %v342, %v338
      %v349 = vsel %vm345, %v344, %v340
      %v350 = vpack.c.bf16 %v349, %v348
      %v351 = vpack.c.bf16 %v347, %v346
      %v352 = vmul.bf16 %v350, %v237
      %v353 = vmul.bf16 %v351, %v241
      %354 = vst [vmem:[#allocation2 + $0x20] sm:$0xff] %v352
      %355 = vst [vmem:[#allocation2 + $0x28] sm:$0xff] %v353
      %356 = vrot.lane.b32.xlu0 %v293, 1
      %v357 = vpop.permute.xlu0 %356
      %358 = vrot.lane.b32.xlu0 %v295, 1
      %v359 = vpop.permute.xlu0 %358
      %360 = vrot.lane.b32.xlu0 %v294, 1
      %v361 = vpop.permute.xlu0 %360
      %362 = vrot.lane.b32.xlu0 %v296, 1
      %v363 = vpop.permute.xlu0 %362
      %vm364 = vcmp.lt.s32.totalorder %v306, 1
      %v365 = vsel %vm364, %v357, %v361
      %v366 = vsel %vm364, %v359, %v363
      %v367 = vsel %vm364, %v361, %v357
      %v368 = vsel %vm364, %v363, %v359
      %v369 = vpack.c.bf16 %v368, %v367
      %v370 = vpack.c.bf16 %v366, %v365
      %v371 = vmul.bf16 %v369, %v245
      %v372 = vmul.bf16 %v370, %v249
      %373 = vst [vmem:[#allocation2 + $0x30] sm:$0xff] %v371
      %374 = vst [vmem:[#allocation2 + $0x38] sm:$0xff] %v372
      %v375 = vpack.c.bf16 %v295, %v293
      %v376 = vpack.c.bf16 %v296, %v294
      %377 = vst [vmem:[#allocation2 + $0x40] sm:$0xff] %v375
      %378 = vst [vmem:[#allocation2 + $0x48] sm:$0xff] %v376
      %379 = vrot.lane.b32.xlu0 %v293, 127
      %v380 = vpop.permute.xlu0 %379
      %381 = vrot.lane.b32.xlu0 %v295, 127
      %v382 = vpop.permute.xlu0 %381
      %383 = vrot.lane.b32.xlu0 %v294, 127
      %v384 = vpop.permute.xlu0 %383
      %385 = vrot.lane.b32.xlu0 %v296, 127
      %v386 = vpop.permute.xlu0 %385
      %vm387 = vcmp.lt.s32.totalorder %v306, 127
      %v388 = vsel %vm387, %v380, %v384
      %v389 = vsel %vm387, %v382, %v386
      %v390 = vsel %vm387, %v384, %v380
      %v391 = vsel %vm387, %v386, %v382
      %v392 = vpack.c.bf16 %v389, %v388
      %v393 = vpack.c.bf16 %v391, %v390
      %v394 = vmul.bf16 %v392, %v253
      %v395 = vmul.bf16 %v393, %v257
      %396 = vst [vmem:[#allocation2 + $0x50] sm:$0xff] %v394
      %397 = vst [vmem:[#allocation2 + $0x58] sm:$0xff] %v395
      %398 = vrot.lane.b32.xlu0 %v293, 113
      %v399 = vpop.permute.xlu0 %398
      %400 = vrot.lane.b32.xlu0 %v295, 113
      %v401 = vpop.permute.xlu0 %400
      %402 = vrot.lane.b32.xlu0 %v294, 113
      %v403 = vpop.permute.xlu0 %402
      %404 = vrot.lane.b32.xlu0 %v296, 113
      %v405 = vpop.permute.xlu0 %404
      %vm406 = vcmp.lt.s32.totalorder %v306, 113
      %v407 = vsel %vm406, %v399, %v403
      %v408 = vsel %vm406, %v401, %v405
      %v409 = vsel %vm406, %v403, %v399
      %v410 = vsel %vm406, %v405, %v401
      %v411 = vpack.c.bf16 %v408, %v407
      %v412 = vpack.c.bf16 %v410, %v409
      %v413 = vmul.bf16 %v411, %v261
      %v414 = vmul.bf16 %v412, %v265
      %415 = vst [vmem:[#allocation2 + $0x60] sm:$0xff] %v413
      %416 = vst [vmem:[#allocation2 + $0x68] sm:$0xff] %v414
      %417 = vrot.lane.b32.xlu0 %v293, 112
      %v418 = vpop.permute.xlu0 %417
      %419 = vrot.lane.b32.xlu0 %v295, 112
      %v420 = vpop.permute.xlu0 %419
      %421 = vrot.lane.b32.xlu0 %v294, 112
      %v422 = vpop.permute.xlu0 %421
      %423 = vrot.lane.b32.xlu0 %v296, 112
      %v424 = vpop.permute.xlu0 %423
      %vm425 = vcmp.lt.s32.totalorder %v306, 112
      %v426 = vsel %vm425, %v418, %v422
      %v427 = vsel %vm425, %v420, %v424
      %v428 = vsel %vm425, %v422, %v418
      %v429 = vsel %vm425, %v424, %v420
      %v430 = vpack.c.bf16 %v427, %v426
      %v431 = vpack.c.bf16 %v429, %v428
      %v432 = vmul.bf16 %v430, %v269
      %v433 = vmul.bf16 %v431, %v273
      %434 = vst [vmem:[#allocation2 + $0x70] sm:$0xff] %v432
      %435 = vst [vmem:[#allocation2 + $0x78] sm:$0xff] %v433
      %436 = vrot.lane.b32.xlu0 %v293, 111
      %v437 = vpop.permute.xlu0 %436
      %438 = vrot.lane.b32.xlu0 %v295, 111
      %v439 = vpop.permute.xlu0 %438
      %440 = vrot.lane.b32.xlu0 %v294, 111
      %v441 = vpop.permute.xlu0 %440
      %442 = vrot.lane.b32.xlu0 %v296, 111
      %v443 = vpop.permute.xlu0 %442
      %vm444 = vcmp.lt.s32.totalorder %v306, 111
      %v445 = vsel %vm444, %v437, %v441
      %v446 = vsel %vm444, %v439, %v443
      %v447 = vsel %vm444, %v441, %v437
      %v448 = vsel %vm444, %v443, %v439
      %v449 = vpack.c.bf16 %v446, %v445
      %v450 = vpack.c.bf16 %v448, %v447
      %v451 = vmul.bf16 %v449, %v285
      %v452 = vmul.bf16 %v450, %v292
      %453 = vst [vmem:[#allocation2 + $0x80] sm:$0xff] %v451
      %454 = vst [vmem:[#allocation2 + $0x88] sm:$0xff] %v452
      %v455 = vld [vmem:[%s2] sm:$0xff]
      %v456 = vld [vmem:[%s2 + $0x8] sm:$0xff]
      %v457 = vld [vmem:[%s2 + $0x10] sm:$0xff]
      %v458 = vld [vmem:[#allocation2] sm:$0xff]
      %v459 = vld [vmem:[#allocation2 + $0x8] sm:$0xff]
      %v460 = vld [vmem:[#allocation2 + $0x10] sm:$0xff]
      %v461 = vld [vmem:[#allocation2 + $0x18] sm:$0xff]
      %v462 = vld [vmem:[#allocation2 + $0x20] sm:$0xff]
      %v463 = vld [vmem:[#allocation2 + $0x28] sm:$0xff]
      %v464 = vld [vmem:[#allocation2 + $0x30] sm:$0xff]
      %v465 = vld [vmem:[#allocation2 + $0x38] sm:$0xff]
      %v466 = vld [vmem:[#allocation2 + $0x40] sm:$0xff]
      %v467 = vld [vmem:[#allocation2 + $0x48] sm:$0xff]
      %v468 = vld [vmem:[#allocation2 + $0x50] sm:$0xff]
      %v469 = vld [vmem:[#allocation2 + $0x58] sm:$0xff]
      %v470 = vld [vmem:[#allocation2 + $0x60] sm:$0xff]
      %v471 = vld [vmem:[#allocation2 + $0x68] sm:$0xff]
      %v472 = vld [vmem:[#allocation2 + $0x70] sm:$0xff]
      %v473 = vld [vmem:[#allocation2 + $0x78] sm:$0xff]
      %v474 = vld [vmem:[#allocation2 + $0x80] sm:$0xff]
      %v475 = vld [vmem:[#allocation2 + $0x88] sm:$0xff]
      %v479 = vunpack.c.l.b16 %v455
      %v480 = vunpack.c.h.b16 %v455
      %v481 = vunpack.c.l.b16 %v456
      %v482 = vunpack.c.h.b16 %v456
      %v483 = vunpack.c.l.b16 %v457
      %v484 = vunpack.c.h.b16 %v457
      %v485 = vpack.c.b16 %v481, %v479
      %v486 = vpack.c.b16 %v482, %v480
      %v487 = vpack.c.b16 %v483, %v483
      %v488 = vpack.c.b16 %v484, %v484
      %vm491 = vcmask 130048
      %v493 = vsel %vm491, %v486, 0
      %v496 = vsel %vm491, %v488, 0
      %498 = vmatprep.subr.bf16.mxu0 %v459
      %499 = vmatpush1.bf16.msra.mxu0 %v458
      %500 = vmatprep.subr.bf16.mxu0 %v461
      %501 = vmatpush1.bf16.msra.mxu0 %v460
      %502 = vmatprep.subr.bf16.mxu0 %v463
      %503 = vmatpush1.bf16.msra.mxu0 %v462
      %504 = vmatprep.subr.bf16.mxu0 %v465
      %505 = vmatpush1.bf16.msra.mxu0 %v464
      %506 = vmatprep.subr.bf16.mxu0 %v467
      %507 = vmatpush1.bf16.msra.mxu0 %v466
      %508 = vmatprep.subr.bf16.mxu0 %v469
      %509 = vmatpush1.bf16.msra.mxu0 %v468
      %510 = vmatprep.subr.bf16.mxu0 %v471
      %511 = vmatpush1.bf16.msra.mxu0 %v470
      %512 = vmatprep.subr.bf16.mxu0 %v473
      %513 = vmatpush1.bf16.msra.mxu0 %v472
      %514 = vmatprep.subr.bf16.mxu0 %v475
      %515 = vmatpush1.bf16.msra.mxu0 %v474
      %516 = vmatprep.subr.bf16.mxu0 0
      %517 = vmatpush1.bf16.msra.mxu0 0
      %518 = vmatprep.subr.bf16.mxu0 0
      %519 = vmatpush1.bf16.msra.mxu0 0
      %520 = vmatprep.subr.bf16.mxu0 0
      %521 = vmatpush1.bf16.msra.mxu0 0
      %522 = vmatprep.subr.bf16.mxu0 0
      %523 = vmatpush1.bf16.msra.mxu0 0
      %524 = vmatprep.subr.bf16.mxu0 0
      %525 = vmatpush1.bf16.msra.mxu0 0
      %526 = vmatprep.subr.bf16.mxu0 0
      %527 = vmatpush1.bf16.msra.mxu0 0
      %528 = vmatprep.subr.bf16.mxu0 0
      %529 = vmatpush1.bf16.msra.mxu0 0
      %530 = vmatprep.mubr.bf16.mxu0 %v493
      %531 = vmatmul.mubr.bf16.gmra.mrb[0].mxu0 %v485
      %v532 = vpop.f32.mrb[0].mxu0
      %v533 = vadd.f32 0.0, %v532
      %v534 = vpop.f32.mrb[0].mxu0
      %v535 = vadd.f32 0.0, %v534
      %v536 = vpop.f32.mrb[0].mxu0
      %v537 = vadd.f32 0.0, %v536
      %v538 = vpop.f32.mrb[0].mxu0
      %v539 = vadd.f32 0.0, %v538
      %540 = vmatprep.mubr.bf16.mxu0 %v496
      %541 = vmatmul.mubr.bf16.gmra.mrb[0].mxu0 %v487
      %v542 = vpop.f32.mrb[0].mxu0
      %v543 = vadd.f32 0.0, %v542
      %v544 = vpop.f32.mrb[0].mxu0
      %v545 = vadd.f32 0.0, %v544
      %v546 = vpop.f32.mrb[0].mxu0
      %v547 = vpop.f32.mrb[0].mxu0
      %548 = vdwg.mxu0
      %v549 = vld [vmem:[%s3] sm:$0xff]
      %v550 = vld [vmem:[%s3 + $0x8] sm:$0xff]
      %552 = vset.pattern.permute.xlu0 0
      %553 = vperm.xlu0 %552, %v549
      %v554 = vpop.permute.xlu0 %553
      %557 = vset.pattern.permute.xlu0 0
      %558 = vperm.xlu0 %557, %v550
      %v559 = vpop.permute.xlu0 %558
      %v561 = vadd.f32 %v533, %v554
      %v562 = vadd.f32 %v535, %v554
      %v563 = vadd.f32 %v537, %v559
      %v564 = vadd.f32 %v539, %v559
      %v565 = vsub.f32 0.0, %v561
      %v566 = vsub.f32 0.0, %v562
      %v567 = vsub.f32 0.0, %v563
      %v568 = vsub.f32 0.0, %v564
      %v569 = vmul.f32 %v565, 1.442695
      %v570 = vpow.pop %v569
      %v571 = vmul.f32 %v566, 1.442695
      %v572 = vpow.pop %v571
      %v573 = vmul.f32 %v567, 1.442695
      %v574 = vpow.pop %v573
      %v575 = vmul.f32 %v568, 1.442695
      %v576 = vpow.pop %v575
      %v577 = vadd.f32 %v570, 1.0
      %v578 = vadd.f32 %v572, 1.0
      %v579 = vadd.f32 %v574, 1.0
      %v580 = vadd.f32 %v576, 1.0
      %v581 = vrcp.pop %v577
      %v582 = vrcp.pop %v578
      %v583 = vrcp.pop %v579
      %v584 = vrcp.pop %v580
      %v585 = vmul.f32 %v561, %v581
      %v586 = vmul.f32 %v562, %v582
      %v587 = vmul.f32 %v563, %v583
      %v588 = vmul.f32 %v564, %v584
      %589 = vrot.lane.b32.xlu0 %v585, 17
      %v590 = vpop.permute.xlu0 %589
      %591 = vrot.lane.b32.xlu0 %v587, 17
      %v592 = vpop.permute.xlu0 %591
      %593 = vrot.lane.b32.xlu0 %v586, 17
      %v594 = vpop.permute.xlu0 %593
      %595 = vrot.lane.b32.xlu0 %v588, 17
      %v596 = vpop.permute.xlu0 %595
      %v597 = vsel %vm307, %v590, %v594
      %v598 = vsel %vm307, %v592, %v596
      %v599 = vsel %vm307, %v594, %v590
      %v600 = vsel %vm307, %v596, %v592
      %v601 = vpack.c.bf16 %v600, %v599
      %v602 = vpack.c.bf16 %v598, %v597
      %v603 = vmul.bf16 %v601, %v212
      %v604 = vmul.bf16 %v602, %v219
      %605 = vst [vmem:[#allocation2] sm:$0xff] %v603
      %606 = vst [vmem:[#allocation2 + $0x8] sm:$0xff] %v604
      %607 = vrot.lane.b32.xlu0 %v585, 16
      %v608 = vpop.permute.xlu0 %607
      %609 = vrot.lane.b32.xlu0 %v587, 16
      %v610 = vpop.permute.xlu0 %609
      %611 = vrot.lane.b32.xlu0 %v586, 16
      %v612 = vpop.permute.xlu0 %611
      %613 = vrot.lane.b32.xlu0 %v588, 16
      %v614 = vpop.permute.xlu0 %613
      %v615 = vsel %vm326, %v608, %v612
      %v616 = vsel %vm326, %v610, %v614
      %v617 = vsel %vm326, %v612, %v608
      %v618 = vsel %vm326, %v614, %v610
      %v619 = vpack.c.bf16 %v618, %v617
      %v620 = vpack.c.bf16 %v616, %v615
      %v621 = vmul.bf16 %v619, %v226
      %v622 = vmul.bf16 %v620, %v233
      %623 = vst [vmem:[#allocation2 + $0x10] sm:$0xff] %v621
      %624 = vst [vmem:[#allocation2 + $0x18] sm:$0xff] %v622
      %625 = vrot.lane.b32.xlu0 %v585, 15
      %v626 = vpop.permute.xlu0 %625
      %627 = vrot.lane.b32.xlu0 %v587, 15
      %v628 = vpop.permute.xlu0 %627
      %629 = vrot.lane.b32.xlu0 %v586, 15
      %v630 = vpop.permute.xlu0 %629
      %631 = vrot.lane.b32.xlu0 %v588, 15
      %v632 = vpop.permute.xlu0 %631
      %v633 = vsel %vm345, %v626, %v630
      %v634 = vsel %vm345, %v628, %v632
      %v635 = vsel %vm345, %v630, %v626
      %v636 = vsel %vm345, %v632, %v628
      %v637 = vpack.c.bf16 %v636, %v635
      %v638 = vpack.c.bf16 %v634, %v633
      %v639 = vmul.bf16 %v637, %v237
      %v640 = vmul.bf16 %v638, %v241
      %641 = vst [vmem:[#allocation2 + $0x20] sm:$0xff] %v639
      %642 = vst [vmem:[#allocation2 + $0x28] sm:$0xff] %v640
      %643 = vrot.lane.b32.xlu0 %v585, 1
      %v644 = vpop.permute.xlu0 %643
      %645 = vrot.lane.b32.xlu0 %v587, 1
      %v646 = vpop.permute.xlu0 %645
      %647 = vrot.lane.b32.xlu0 %v586, 1
      %v648 = vpop.permute.xlu0 %647
      %649 = vrot.lane.b32.xlu0 %v588, 1
      %v650 = vpop.permute.xlu0 %649
      %v651 = vsel %vm364, %v644, %v648
      %v652 = vsel %vm364, %v646, %v650
      %v653 = vsel %vm364, %v648, %v644
      %v654 = vsel %vm364, %v650, %v646
      %v655 = vpack.c.bf16 %v654, %v653
      %v656 = vpack.c.bf16 %v652, %v651
      %v657 = vmul.bf16 %v655, %v245
      %v658 = vmul.bf16 %v656, %v249
      %659 = vst [vmem:[#allocation2 + $0x30] sm:$0xff] %v657
      %660 = vst [vmem:[#allocation2 + $0x38] sm:$0xff] %v658
      %v661 = vpack.c.bf16 %v587, %v585
      %v662 = vpack.c.bf16 %v588, %v586
      %663 = vst [vmem:[#allocation2 + $0x40] sm:$0xff] %v661
      %664 = vst [vmem:[#allocation2 + $0x48] sm:$0xff] %v662
      %665 = vrot.lane.b32.xlu0 %v585, 127
      %v666 = vpop.permute.xlu0 %665
      %667 = vrot.lane.b32.xlu0 %v587, 127
      %v668 = vpop.permute.xlu0 %667
      %669 = vrot.lane.b32.xlu0 %v586, 127
      %v670 = vpop.permute.xlu0 %669
      %671 = vrot.lane.b32.xlu0 %v588, 127
      %v672 = vpop.permute.xlu0 %671
      %v673 = vsel %vm387, %v666, %v670
      %v674 = vsel %vm387, %v668, %v672
      %v675 = vsel %vm387, %v670, %v666
      %v676 = vsel %vm387, %v672, %v668
      %v677 = vpack.c.bf16 %v674, %v673
      %v678 = vpack.c.bf16 %v676, %v675
      %v679 = vmul.bf16 %v677, %v253
      %v680 = vmul.bf16 %v678, %v257
      %681 = vst [vmem:[#allocation2 + $0x50] sm:$0xff] %v679
      %682 = vst [vmem:[#allocation2 + $0x58] sm:$0xff] %v680
      %683 = vrot.lane.b32.xlu0 %v585, 113
      %v684 = vpop.permute.xlu0 %683
      %685 = vrot.lane.b32.xlu0 %v587, 113
      %v686 = vpop.permute.xlu0 %685
      %687 = vrot.lane.b32.xlu0 %v586, 113
      %v688 = vpop.permute.xlu0 %687
      %689 = vrot.lane.b32.xlu0 %v588, 113
      %v690 = vpop.permute.xlu0 %689
      %v691 = vsel %vm406, %v684, %v688
      %v692 = vsel %vm406, %v686, %v690
      %v693 = vsel %vm406, %v688, %v684
      %v694 = vsel %vm406, %v690, %v686
      %v695 = vpack.c.bf16 %v692, %v691
      %v696 = vpack.c.bf16 %v694, %v693
      %v697 = vmul.bf16 %v695, %v261
      %v698 = vmul.bf16 %v696, %v265
      %699 = vst [vmem:[#allocation2 + $0x60] sm:$0xff] %v697
      %700 = vst [vmem:[#allocation2 + $0x68] sm:$0xff] %v698
      %701 = vrot.lane.b32.xlu0 %v585, 112
      %v702 = vpop.permute.xlu0 %701
      %703 = vrot.lane.b32.xlu0 %v587, 112
      %v704 = vpop.permute.xlu0 %703
      %705 = vrot.lane.b32.xlu0 %v586, 112
      %v706 = vpop.permute.xlu0 %705
      %707 = vrot.lane.b32.xlu0 %v588, 112
      %v708 = vpop.permute.xlu0 %707
      %v709 = vsel %vm425, %v702, %v706
      %v710 = vsel %vm425, %v704, %v708
      %v711 = vsel %vm425, %v706, %v702
      %v712 = vsel %vm425, %v708, %v704
      %v713 = vpack.c.bf16 %v710, %v709
      %v714 = vpack.c.bf16 %v712, %v711
      %v715 = vmul.bf16 %v713, %v269
      %v716 = vmul.bf16 %v714, %v273
      %717 = vst [vmem:[#allocation2 + $0x70] sm:$0xff] %v715
      %718 = vst [vmem:[#allocation2 + $0x78] sm:$0xff] %v716
      %719 = vrot.lane.b32.xlu0 %v585, 111
      %v720 = vpop.permute.xlu0 %719
      %721 = vrot.lane.b32.xlu0 %v587, 111
      %v722 = vpop.permute.xlu0 %721
      %723 = vrot.lane.b32.xlu0 %v586, 111
      %v724 = vpop.permute.xlu0 %723
      %725 = vrot.lane.b32.xlu0 %v588, 111
      %v726 = vpop.permute.xlu0 %725
      %v727 = vsel %vm444, %v720, %v724
      %v728 = vsel %vm444, %v722, %v726
      %v729 = vsel %vm444, %v724, %v720
      %v730 = vsel %vm444, %v726, %v722
      %v731 = vpack.c.bf16 %v728, %v727
      %v732 = vpack.c.bf16 %v730, %v729
      %v733 = vmul.bf16 %v731, %v285
      %v734 = vmul.bf16 %v732, %v292
      %735 = vst [vmem:[#allocation2 + $0x80] sm:$0xff] %v733
      %736 = vst [vmem:[#allocation2 + $0x88] sm:$0xff] %v734
      %v737 = vld [vmem:[%s2 + $0x18] sm:$0xff]
      %v738 = vld [vmem:[%s2 + $0x20] sm:$0xff]
      %v739 = vld [vmem:[#allocation2] sm:$0xff]
      %v740 = vld [vmem:[#allocation2 + $0x8] sm:$0xff]
      %v741 = vld [vmem:[#allocation2 + $0x10] sm:$0xff]
      %v742 = vld [vmem:[#allocation2 + $0x18] sm:$0xff]
      %v743 = vld [vmem:[#allocation2 + $0x20] sm:$0xff]
      %v744 = vld [vmem:[#allocation2 + $0x28] sm:$0xff]
      %v745 = vld [vmem:[#allocation2 + $0x30] sm:$0xff]
      %v746 = vld [vmem:[#allocation2 + $0x38] sm:$0xff]
      %v747 = vld [vmem:[#allocation2 + $0x40] sm:$0xff]
      %v748 = vld [vmem:[#allocation2 + $0x48] sm:$0xff]
      %v749 = vld [vmem:[#allocation2 + $0x50] sm:$0xff]
      %v750 = vld [vmem:[#allocation2 + $0x58] sm:$0xff]
      %v751 = vld [vmem:[#allocation2 + $0x60] sm:$0xff]
      %v752 = vld [vmem:[#allocation2 + $0x68] sm:$0xff]
      %v753 = vld [vmem:[#allocation2 + $0x70] sm:$0xff]
      %v754 = vld [vmem:[#allocation2 + $0x78] sm:$0xff]
      %v755 = vld [vmem:[#allocation2 + $0x80] sm:$0xff]
      %v756 = vld [vmem:[#allocation2 + $0x88] sm:$0xff]
      %v757 = vld [vmem:[%s3 + $0x10] sm:$0xff]
      %v758 = vld [vmem:[%s3 + $0x18] sm:$0xff]
      %760 = vset.pattern.permute.xlu0 0
      %761 = vperm.xlu0 %760, %v757
      %v762 = vpop.permute.xlu0 %761
      %765 = vset.pattern.permute.xlu0 0
      %766 = vperm.xlu0 %765, %v758
      %v767 = vpop.permute.xlu0 %766
      %v771 = vunpack.c.l.b16 %v737
      %v772 = vunpack.c.h.b16 %v737
      %v773 = vunpack.c.l.b16 %v738
      %v774 = vunpack.c.h.b16 %v738
      %v775 = vpack.c.b16 %v773, %v771
      %v776 = vpack.c.b16 %v774, %v772
      %v779 = vsel %vm491, %v776, 0
      %781 = vmatprep.subr.bf16.mxu0 %v740
      %782 = vmatpush1.bf16.msra.mxu0 %v739
      %783 = vmatprep.subr.bf16.mxu0 %v742
      %784 = vmatpush1.bf16.msra.mxu0 %v741
      %785 = vmatprep.subr.bf16.mxu0 %v744
      %786 = vmatpush1.bf16.msra.mxu0 %v743
      %787 = vmatprep.subr.bf16.mxu0 %v746
      %788 = vmatpush1.bf16.msra.mxu0 %v745
      %789 = vmatprep.subr.bf16.mxu0 %v748
      %790 = vmatpush1.bf16.msra.mxu0 %v747
      %791 = vmatprep.subr.bf16.mxu0 %v750
      %792 = vmatpush1.bf16.msra.mxu0 %v749
      %793 = vmatprep.subr.bf16.mxu0 %v752
      %794 = vmatpush1.bf16.msra.mxu0 %v751
      %795 = vmatprep.subr.bf16.mxu0 %v754
      %796 = vmatpush1.bf16.msra.mxu0 %v753
      %797 = vmatprep.subr.bf16.mxu0 %v756
      %798 = vmatpush1.bf16.msra.mxu0 %v755
      %799 = vmatprep.subr.bf16.mxu0 0
      %800 = vmatpush1.bf16.msra.mxu0 0
      %801 = vmatprep.subr.bf16.mxu0 0
      %802 = vmatpush1.bf16.msra.mxu0 0
      %803 = vmatprep.subr.bf16.mxu0 0
      %804 = vmatpush1.bf16.msra.mxu0 0
      %805 = vmatprep.subr.bf16.mxu0 0
      %806 = vmatpush1.bf16.msra.mxu0 0
      %807 = vmatprep.subr.bf16.mxu0 0
      %808 = vmatpush1.bf16.msra.mxu0 0
      %809 = vmatprep.subr.bf16.mxu0 0
      %810 = vmatpush1.bf16.msra.mxu0 0
      %811 = vmatprep.subr.bf16.mxu0 0
      %812 = vmatpush1.bf16.msra.mxu0 0
      %813 = vmatprep.mubr.bf16.mxu0 %v779
      %814 = vmatmul.mubr.bf16.gmra.mrb[0].mxu0 %v775
      %v815 = vpop.f32.mrb[0].mxu0
      %v816 = vadd.f32 %v762, %v815
      %v817 = vpop.f32.mrb[0].mxu0
      %v818 = vadd.f32 %v762, %v817
      %v819 = vpop.f32.mrb[0].mxu0
      %v820 = vadd.f32 %v767, %v819
      %v821 = vpop.f32.mrb[0].mxu0
      %v822 = vadd.f32 %v767, %v821
      %823 = vdwg.mxu0
      %v824 = vadd.f32 %v816, %v293
      %v825 = vadd.f32 %v818, %v294
      %v826 = vadd.f32 %v820, %v295
      %v827 = vadd.f32 %v822, %v296
      %v828 = vsub.f32 0.0, %v824
      %v829 = vsub.f32 0.0, %v825
      %v830 = vsub.f32 0.0, %v826
      %v831 = vsub.f32 0.0, %v827
      %v832 = vmul.f32 %v828, 1.442695
      %v833 = vpow.pop %v832
      %v834 = vmul.f32 %v829, 1.442695
      %v835 = vpow.pop %v834
      %v836 = vmul.f32 %v830, 1.442695
      %v837 = vpow.pop %v836
      %v838 = vmul.f32 %v831, 1.442695
      %v839 = vpow.pop %v838
      %v840 = vadd.f32 %v833, 1.0
      %v841 = vadd.f32 %v835, 1.0
      %v842 = vadd.f32 %v837, 1.0
      %v843 = vadd.f32 %v839, 1.0
      %v844 = vrcp.pop %v840
      %v845 = vrcp.pop %v841
      %v846 = vrcp.pop %v842
      %v847 = vrcp.pop %v843
      %v848 = vmul.f32 %v824, %v844
      %v849 = vmul.f32 %v825, %v845
      %v850 = vmul.f32 %v826, %v846
      %v851 = vmul.f32 %v827, %v847
      %852 = vrot.lane.b32.xlu0 %v543, 17
      %v853 = vpop.permute.xlu0 %852
      %854 = vrot.lane.b32.xlu0 %v545, 17
      %v855 = vpop.permute.xlu0 %854
      %v856 = vsel %vm307, %v853, %v855
      %v857 = vsel %vm307, %v855, %v853
      %v858 = vpack.c.bf16 %v857, %v857
      %v859 = vpack.c.bf16 %v856, %v856
      %v860 = vmul.bf16 %v858, %v212
      %v861 = vmul.bf16 %v859, %v219
      %862 = vst [vmem:[#allocation2] sm:$0xf] %v860
      %863 = vst [vmem:[#allocation2 + $0x8] sm:$0xf] %v861
      %864 = vrot.lane.b32.xlu0 %v543, 16
      %v865 = vpop.permute.xlu0 %864
      %866 = vrot.lane.b32.xlu0 %v545, 16
      %v867 = vpop.permute.xlu0 %866
      %v868 = vsel %vm326, %v865, %v867
      %v869 = vsel %vm326, %v867, %v865
      %v870 = vpack.c.bf16 %v869, %v869
      %v871 = vpack.c.bf16 %v868, %v868
      %v872 = vmul.bf16 %v870, %v226
      %v873 = vmul.bf16 %v871, %v233
      %v876 = vrot.slane %v872, 4
      %v877 = vrot.slane %v873, 4
      %880 = vst [vmem:[#allocation2] sm:$0xf0] %v876
      %881 = vst [vmem:[#allocation2 + $0x8] sm:$0xf0] %v877
      %882 = vrot.lane.b32.xlu0 %v543, 15
      %v883 = vpop.permute.xlu0 %882
      %884 = vrot.lane.b32.xlu0 %v545, 15
      %v885 = vpop.permute.xlu0 %884
      %v886 = vsel %vm345, %v883, %v885
      %v887 = vsel %vm345, %v885, %v883
      %v888 = vpack.c.bf16 %v887, %v887
      %v889 = vpack.c.bf16 %v886, %v886
      %v890 = vmul.bf16 %v888, %v237
      %v891 = vmul.bf16 %v889, %v241
      %892 = vst [vmem:[#allocation2 + $0x10] sm:$0xf] %v890
      %893 = vst [vmem:[#allocation2 + $0x18] sm:$0xf] %v891
      %894 = vrot.lane.b32.xlu0 %v543, 1
      %v895 = vpop.permute.xlu0 %894
      %896 = vrot.lane.b32.xlu0 %v545, 1
      %v897 = vpop.permute.xlu0 %896
      %v898 = vsel %vm364, %v895, %v897
      %v899 = vsel %vm364, %v897, %v895
      %v900 = vpack.c.bf16 %v899, %v899
      %v901 = vpack.c.bf16 %v898, %v898
      %v902 = vmul.bf16 %v900, %v245
      %v903 = vmul.bf16 %v901, %v249
      %v906 = vrot.slane %v902, 4
      %v907 = vrot.slane %v903, 4
      %910 = vst [vmem:[#allocation2 + $0x10] sm:$0xf0] %v906
      %911 = vst [vmem:[#allocation2 + $0x18] sm:$0xf0] %v907
      %v912 = vpack.c.bf16 %v543, %v543
      %v913 = vpack.c.bf16 %v545, %v545
      %914 = vst [vmem:[#allocation2 + $0x20] sm:$0xf] %v912
      %915 = vst [vmem:[#allocation2 + $0x28] sm:$0xf] %v913
      %916 = vrot.lane.b32.xlu0 %v543, 127
      %v917 = vpop.permute.xlu0 %916
      %918 = vrot.lane.b32.xlu0 %v545, 127
      %v919 = vpop.permute.xlu0 %918
      %v920 = vsel %vm387, %v917, %v919
      %v921 = vsel %vm387, %v919, %v917
      %v922 = vpack.c.bf16 %v920, %v920
      %v923 = vpack.c.bf16 %v921, %v921
      %v924 = vmul.bf16 %v922, %v253
      %v925 = vmul.bf16 %v923, %v257
      %v928 = vrot.slane %v924, 4
      %v929 = vrot.slane %v925, 4
      %932 = vst [vmem:[#allocation2 + $0x20] sm:$0xf0] %v928
      %933 = vst [vmem:[#allocation2 + $0x28] sm:$0xf0] %v929
      %934 = vrot.lane.b32.xlu0 %v543, 113
      %v935 = vpop.permute.xlu0 %934
      %936 = vrot.lane.b32.xlu0 %v545, 113
      %v937 = vpop.permute.xlu0 %936
      %v938 = vsel %vm406, %v935, %v937
      %v939 = vsel %vm406, %v937, %v935
      %v940 = vpack.c.bf16 %v938, %v938
      %v941 = vpack.c.bf16 %v939, %v939
      %v942 = vmul.bf16 %v940, %v261
      %v943 = vmul.bf16 %v941, %v265
      %944 = vst [vmem:[#allocation2 + $0x30] sm:$0xf] %v942
      %945 = vst [vmem:[#allocation2 + $0x38] sm:$0xf] %v943
      %946 = vrot.lane.b32.xlu0 %v543, 112
      %v947 = vpop.permute.xlu0 %946
      %948 = vrot.lane.b32.xlu0 %v545, 112
      %v949 = vpop.permute.xlu0 %948
      %v950 = vsel %vm425, %v947, %v949
      %v951 = vsel %vm425, %v949, %v947
      %v952 = vpack.c.bf16 %v950, %v950
      %v953 = vpack.c.bf16 %v951, %v951
      %v954 = vmul.bf16 %v952, %v269
      %v955 = vmul.bf16 %v953, %v273
      %v958 = vrot.slane %v954, 4
      %v959 = vrot.slane %v955, 4
      %962 = vst [vmem:[#allocation2 + $0x30] sm:$0xf0] %v958
      %963 = vst [vmem:[#allocation2 + $0x38] sm:$0xf0] %v959
      %964 = vrot.lane.b32.xlu0 %v543, 111
      %v965 = vpop.permute.xlu0 %964
      %966 = vrot.lane.b32.xlu0 %v545, 111
      %v967 = vpop.permute.xlu0 %966
      %v968 = vsel %vm444, %v965, %v967
      %v969 = vsel %vm444, %v967, %v965
      %v970 = vpack.c.bf16 %v968, %v968
      %v971 = vpack.c.bf16 %v969, %v969
      %v972 = vmul.bf16 %v970, %v285
      %v973 = vmul.bf16 %v971, %v292
      %974 = vst [vmem:[#allocation2 + $0x40] sm:$0xf] %v972
      %975 = vst [vmem:[#allocation2 + $0x48] sm:$0xf] %v973
      %v976 = vld [vmem:[%s2 + $0x28] sm:$0xf]
      %v977 = vld [vmem:[%s2 + $0x30] sm:$0xf]
      %v978 = vld [vmem:[#allocation2] sm:$0xff]
      %v979 = vld [vmem:[#allocation2 + $0x8] sm:$0xff]
      %v980 = vld [vmem:[#allocation2 + $0x10] sm:$0xff]
      %v981 = vld [vmem:[#allocation2 + $0x18] sm:$0xff]
      %v982 = vld [vmem:[#allocation2 + $0x20] sm:$0xff]
      %v983 = vld [vmem:[#allocation2 + $0x28] sm:$0xff]
      %v984 = vld [vmem:[#allocation2 + $0x30] sm:$0xff]
      %v985 = vld [vmem:[#allocation2 + $0x38] sm:$0xff]
      %v986 = vld [vmem:[#allocation2 + $0x40] sm:$0xf]
      %v987 = vld [vmem:[#allocation2 + $0x48] sm:$0xf]
      %v990 = vunpack.c.l.b16 %v976
      %v991 = vunpack.c.l.b16 %v977
      %v992 = vpack.c.b16 %v991, %v990
      %vm993 = vcmask 588800
      %v995 = vsel %vm993, %v992, 0
      %vm997 = vcmask 1043456
      %v999 = vsel %vm997, %v986, 0
      %v1002 = vsel %vm997, %v987, 0
      %1004 = vmatprep.subr.bf16.mxu0 %v979
      %1005 = vmatpush1.bf16.msra.mxu0 %v978
      %1006 = vmatprep.subr.bf16.mxu0 %v981
      %1007 = vmatpush1.bf16.msra.mxu0 %v980
      %1008 = vmatprep.subr.bf16.mxu0 %v983
      %1009 = vmatpush1.bf16.msra.mxu0 %v982
      %1010 = vmatprep.subr.bf16.mxu0 %v985
      %1011 = vmatpush1.bf16.msra.mxu0 %v984
      %1012 = vmatprep.subr.bf16.mxu0 %v1002
      %1013 = vmatpush1.bf16.msra.mxu0 %v999
      %1014 = vmatprep.subr.bf16.mxu0 0
      %1015 = vmatpush1.bf16.msra.mxu0 0
      %1016 = vmatprep.subr.bf16.mxu0 0
      %1017 = vmatpush1.bf16.msra.mxu0 0
      %1018 = vmatprep.subr.bf16.mxu0 0
      %1019 = vmatpush1.bf16.msra.mxu0 0
      %1020 = vmatprep.subr.bf16.mxu0 0
      %1021 = vmatpush1.bf16.msra.mxu0 0
      %1022 = vmatprep.subr.bf16.mxu0 0
      %1023 = vmatpush1.bf16.msra.mxu0 0
      %1024 = vmatprep.subr.bf16.mxu0 0
      %1025 = vmatpush1.bf16.msra.mxu0 0
      %1026 = vmatprep.subr.bf16.mxu0 0
      %1027 = vmatpush1.bf16.msra.mxu0 0
      %1028 = vmatprep.subr.bf16.mxu0 0
      %1029 = vmatpush1.bf16.msra.mxu0 0
      %1030 = vmatprep.subr.bf16.mxu0 0
      %1031 = vmatpush1.bf16.msra.mxu0 0
      %1032 = vmatprep.subr.bf16.mxu0 0
      %1033 = vmatpush1.bf16.msra.mxu0 0
      %1034 = vmatprep.subr.bf16.mxu0 0
      %1035 = vmatpush1.bf16.msra.mxu0 0
      %1036 = vmatprep.mubr.bf16.mxu0 0
      %1037 = vmatmul.mubr.bf16.gmra.mrb[0].mxu0 %v995
      %v1038 = vpop.f32.mrb[0].mxu0
      %v1039 = vadd.f32 0.0, %v1038
      %v1040 = vpop.f32.mrb[0].mxu0
      %v1041 = vadd.f32 0.0, %v1040
      %v1042 = vpop.f32.mrb[0].mxu0
      %v1043 = vadd.f32 0.0, %v1042
      %v1044 = vpop.f32.mrb[0].mxu0
      %v1045 = vadd.f32 0.0, %v1044
      %1046 = vdwg.mxu0
      %v1047 = vld [vmem:[%s3 + $0x20] sm:$0xff]
      %1049 = vset.pattern.permute.xlu0 0
      %1050 = vperm.xlu0 %1049, %v1047
      %v1051 = vpop.permute.xlu0 %1050
      %v1053 = vadd.f32 %v1039, %v1051
      %v1054 = vadd.f32 %v1041, %v1051
      %v1055 = vsub.f32 0.0, %v1053
      %v1056 = vsub.f32 0.0, %v1054
      %v1057 = vmul.f32 %v1055, 1.442695
      %v1058 = vpow.pop %v1057
      %v1059 = vmul.f32 %v1056, 1.442695
      %v1060 = vpow.pop %v1059
      %v1061 = vadd.f32 %v1058, 1.0
      %v1062 = vadd.f32 %v1060, 1.0
      %v1063 = vrcp.pop %v1061
      %v1064 = vrcp.pop %v1062
      %v1065 = vmul.f32 %v1053, %v1063
      %v1066 = vmul.f32 %v1054, %v1064
      %1067 = vrot.lane.b32.xlu0 %v1065, 17
      %v1068 = vpop.permute.xlu0 %1067
      %1069 = vrot.lane.b32.xlu0 %v1066, 17
      %v1070 = vpop.permute.xlu0 %1069
      %v1071 = vsel %vm307, %v1068, %v1070
      %v1072 = vsel %vm307, %v1070, %v1068
      %v1073 = vpack.c.bf16 %v1072, %v1072
      %v1074 = vpack.c.bf16 %v1071, %v1071
      %v1075 = vmul.bf16 %v1073, %v212
      %v1076 = vmul.bf16 %v1074, %v219
      %1077 = vst [vmem:[#allocation2] sm:$0xf] %v1075
      %1078 = vst [vmem:[#allocation2 + $0x8] sm:$0xf] %v1076
      %1079 = vrot.lane.b32.xlu0 %v1065, 16
      %v1080 = vpop.permute.xlu0 %1079
      %1081 = vrot.lane.b32.xlu0 %v1066, 16
      %v1082 = vpop.permute.xlu0 %1081
      %v1083 = vsel %vm326, %v1080, %v1082
      %v1084 = vsel %vm326, %v1082, %v1080
      %v1085 = vpack.c.bf16 %v1084, %v1084
      %v1086 = vpack.c.bf16 %v1083, %v1083
      %v1087 = vmul.bf16 %v1085, %v226
      %v1088 = vmul.bf16 %v1086, %v233
      %v1091 = vrot.slane %v1087, 4
      %v1092 = vrot.slane %v1088, 4
      %1095 = vst [vmem:[#allocation2] sm:$0xf0] %v1091
      %1096 = vst [vmem:[#allocation2 + $0x8] sm:$0xf0] %v1092
      %1097 = vrot.lane.b32.xlu0 %v1065, 15
      %v1098 = vpop.permute.xlu0 %1097
      %1099 = vrot.lane.b32.xlu0 %v1066, 15
      %v1100 = vpop.permute.xlu0 %1099
      %v1101 = vsel %vm345, %v1098, %v1100
      %v1102 = vsel %vm345, %v1100, %v1098
      %v1103 = vpack.c.bf16 %v1102, %v1102
      %v1104 = vpack.c.bf16 %v1101, %v1101
      %v1105 = vmul.bf16 %v1103, %v237
      %v1106 = vmul.bf16 %v1104, %v241
      %1107 = vst [vmem:[#allocation2 + $0x10] sm:$0xf] %v1105
      %1108 = vst [vmem:[#allocation2 + $0x18] sm:$0xf] %v1106
      %1109 = vrot.lane.b32.xlu0 %v1065, 1
      %v1110 = vpop.permute.xlu0 %1109
      %1111 = vrot.lane.b32.xlu0 %v1066, 1
      %v1112 = vpop.permute.xlu0 %1111
      %v1113 = vsel %vm364, %v1110, %v1112
      %v1114 = vsel %vm364, %v1112, %v1110
      %v1115 = vpack.c.bf16 %v1114, %v1114
      %v1116 = vpack.c.bf16 %v1113, %v1113
      %v1117 = vmul.bf16 %v1115, %v245
      %v1118 = vmul.bf16 %v1116, %v249
      %v1121 = vrot.slane %v1117, 4
      %v1122 = vrot.slane %v1118, 4
      %1125 = vst [vmem:[#allocation2 + $0x10] sm:$0xf0] %v1121
      %1126 = vst [vmem:[#allocation2 + $0x18] sm:$0xf0] %v1122
      %v1127 = vpack.c.bf16 %v1065, %v1065
      %v1128 = vpack.c.bf16 %v1066, %v1066
      %1129 = vst [vmem:[#allocation2 + $0x20] sm:$0xf] %v1127
      %1130 = vst [vmem:[#allocation2 + $0x28] sm:$0xf] %v1128
      %1131 = vrot.lane.b32.xlu0 %v1065, 127
      %v1132 = vpop.permute.xlu0 %1131
      %1133 = vrot.lane.b32.xlu0 %v1066, 127
      %v1134 = vpop.permute.xlu0 %1133
      %v1135 = vsel %vm387, %v1132, %v1134
      %v1136 = vsel %vm387, %v1134, %v1132
      %v1137 = vpack.c.bf16 %v1135, %v1135
      %v1138 = vpack.c.bf16 %v1136, %v1136
      %v1139 = vmul.bf16 %v1137, %v253
      %v1140 = vmul.bf16 %v1138, %v257
      %v1143 = vrot.slane %v1139, 4
      %v1144 = vrot.slane %v1140, 4
      %1147 = vst [vmem:[#allocation2 + $0x20] sm:$0xf0] %v1143
      %1148 = vst [vmem:[#allocation2 + $0x28] sm:$0xf0] %v1144
      %1149 = vrot.lane.b32.xlu0 %v1065, 113
      %v1150 = vpop.permute.xlu0 %1149
      %1151 = vrot.lane.b32.xlu0 %v1066, 113
      %v1152 = vpop.permute.xlu0 %1151
      %v1153 = vsel %vm406, %v1150, %v1152
      %v1154 = vsel %vm406, %v1152, %v1150
      %v1155 = vpack.c.bf16 %v1153, %v1153
      %v1156 = vpack.c.bf16 %v1154, %v1154
      %v1157 = vmul.bf16 %v1155, %v261
      %v1158 = vmul.bf16 %v1156, %v265
      %1159 = vst [vmem:[#allocation2 + $0x30] sm:$0xf] %v1157
      %1160 = vst [vmem:[#allocation2 + $0x38] sm:$0xf] %v1158
      %1161 = vrot.lane.b32.xlu0 %v1065, 112
      %v1162 = vpop.permute.xlu0 %1161
      %1163 = vrot.lane.b32.xlu0 %v1066, 112
      %v1164 = vpop.permute.xlu0 %1163
      %v1165 = vsel %vm425, %v1162, %v1164
      %v1166 = vsel %vm425, %v1164, %v1162
      %v1167 = vpack.c.bf16 %v1165, %v1165
      %v1168 = vpack.c.bf16 %v1166, %v1166
      %v1169 = vmul.bf16 %v1167, %v269
      %v1170 = vmul.bf16 %v1168, %v273
      %v1173 = vrot.slane %v1169, 4
      %v1174 = vrot.slane %v1170, 4
      %1177 = vst [vmem:[#allocation2 + $0x30] sm:$0xf0] %v1173
      %1178 = vst [vmem:[#allocation2 + $0x38] sm:$0xf0] %v1174
      %1179 = vrot.lane.b32.xlu0 %v1065, 111
      %v1180 = vpop.permute.xlu0 %1179
      %1181 = vrot.lane.b32.xlu0 %v1066, 111
      %v1182 = vpop.permute.xlu0 %1181
      %v1183 = vsel %vm444, %v1180, %v1182
      %v1184 = vsel %vm444, %v1182, %v1180
      %v1185 = vpack.c.bf16 %v1183, %v1183
      %v1186 = vpack.c.bf16 %v1184, %v1184
      %v1187 = vmul.bf16 %v1185, %v285
      %v1188 = vmul.bf16 %v1186, %v292
      %1189 = vst [vmem:[#allocation2 + $0x40] sm:$0xf] %v1187
      %1190 = vst [vmem:[#allocation2 + $0x48] sm:$0xf] %v1188
      %v1191 = vld [vmem:[%s2 + $0x38] sm:$0xf]
      %v1192 = vld [vmem:[#allocation2] sm:$0xff]
      %v1193 = vld [vmem:[#allocation2 + $0x8] sm:$0xff]
      %v1194 = vld [vmem:[#allocation2 + $0x10] sm:$0xff]
      %v1195 = vld [vmem:[#allocation2 + $0x18] sm:$0xff]
      %v1196 = vld [vmem:[#allocation2 + $0x20] sm:$0xff]
      %v1197 = vld [vmem:[#allocation2 + $0x28] sm:$0xff]
      %v1198 = vld [vmem:[#allocation2 + $0x30] sm:$0xff]
      %v1199 = vld [vmem:[#allocation2 + $0x38] sm:$0xff]
      %v1200 = vld [vmem:[#allocation2 + $0x40] sm:$0xf]
      %v1201 = vld [vmem:[#allocation2 + $0x48] sm:$0xf]
      %v1202 = vld [vmem:[%s3 + $0x28] sm:$0xff]
      %1204 = vset.pattern.permute.xlu0 0
      %1205 = vperm.xlu0 %1204, %v1202
      %v1206 = vpop.permute.xlu0 %1205
      %v1209 = vsel %vm993, %v1191, 0
      %v1212 = vsel %vm997, %v1200, 0
      %v1215 = vsel %vm997, %v1201, 0
      %1217 = vmatprep.subr.bf16.mxu0 %v1193
      %1218 = vmatpush1.bf16.msra.mxu0 %v1192
      %1219 = vmatprep.subr.bf16.mxu0 %v1195
      %1220 = vmatpush1.bf16.msra.mxu0 %v1194
      %1221 = vmatprep.subr.bf16.mxu0 %v1197
      %1222 = vmatpush1.bf16.msra.mxu0 %v1196
      %1223 = vmatprep.subr.bf16.mxu0 %v1199
      %1224 = vmatpush1.bf16.msra.mxu0 %v1198
      %1225 = vmatprep.subr.bf16.mxu0 %v1215
      %1226 = vmatpush1.bf16.msra.mxu0 %v1212
      %1227 = vmatprep.subr.bf16.mxu0 0
      %1228 = vmatpush1.bf16.msra.mxu0 0
      %1229 = vmatprep.subr.bf16.mxu0 0
      %1230 = vmatpush1.bf16.msra.mxu0 0
      %1231 = vmatprep.subr.bf16.mxu0 0
      %1232 = vmatpush1.bf16.msra.mxu0 0
      %1233 = vmatprep.subr.bf16.mxu0 0
      %1234 = vmatpush1.bf16.msra.mxu0 0
      %1235 = vmatprep.subr.bf16.mxu0 0
      %1236 = vmatpush1.bf16.msra.mxu0 0
      %1237 = vmatprep.subr.bf16.mxu0 0
      %1238 = vmatpush1.bf16.msra.mxu0 0
      %1239 = vmatprep.subr.bf16.mxu0 0
      %1240 = vmatpush1.bf16.msra.mxu0 0
      %1241 = vmatprep.subr.bf16.mxu0 0
      %1242 = vmatpush1.bf16.msra.mxu0 0
      %1243 = vmatprep.subr.bf16.mxu0 0
      %1244 = vmatpush1.bf16.msra.mxu0 0
      %1245 = vmatprep.subr.bf16.mxu0 0
      %1246 = vmatpush1.bf16.msra.mxu0 0
      %1247 = vmatprep.subr.bf16.mxu0 0
      %1248 = vmatpush1.bf16.msra.mxu0 0
      %1249 = vmatprep.mubr.bf16.mxu0 0
      %1250 = vmatmul.mubr.bf16.gmra.mrb[0].mxu0 %v1209
      %v1251 = vpop.f32.mrb[0].mxu0
      %v1252 = vadd.f32 %v1206, %v1251
      %v1253 = vpop.f32.mrb[0].mxu0
      %v1254 = vadd.f32 %v1206, %v1253
      %v1255 = vpop.f32.mrb[0].mxu0
      %v1256 = vpop.f32.mrb[0].mxu0
      %1257 = vdwg.mxu0
      %v1258 = vadd.f32 %v1252, %v543
      %v1259 = vadd.f32 %v1254, %v545
      %v1260 = vsub.f32 0.0, %v1258
      %v1261 = vsub.f32 0.0, %v1259
      %v1262 = vmul.f32 %v1260, 1.442695
      %v1263 = vpow.pop %v1262
      %v1264 = vmul.f32 %v1261, 1.442695
      %v1265 = vpow.pop %v1264
      %v1266 = vadd.f32 %v1263, 1.0
      %v1267 = vadd.f32 %v1265, 1.0
      %v1268 = vrcp.pop %v1266
      %v1269 = vrcp.pop %v1267
      %v1270 = vmul.f32 %v1258, %v1268
      %v1271 = vmul.f32 %v1259, %v1269
      %1272 = vrot.lane.b32.xlu0 %v1043, 17
      %v1273 = vpop.permute.xlu0 %1272
      %1274 = vrot.lane.b32.xlu0 %v1045, 17
      %v1275 = vpop.permute.xlu0 %1274
      %v1276 = vsel %vm307, %v1273, %v1275
      %v1277 = vsel %vm307, %v1275, %v1273
      %v1278 = vpack.c.bf16 %v1277, %v1277
      %v1279 = vpack.c.bf16 %v1276, %v1276
      %v1280 = vmul.bf16 %v1278, %v212
      %v1281 = vmul.bf16 %v1279, %v219
      %1282 = vst [vmem:[#allocation2] sm:$0xf] %v1280
      %1283 = vst [vmem:[#allocation2 + $0x8] sm:$0xf] %v1281
      %1284 = vrot.lane.b32.xlu0 %v1043, 16
      %v1285 = vpop.permute.xlu0 %1284
      %1286 = vrot.lane.b32.xlu0 %v1045, 16
      %v1287 = vpop.permute.xlu0 %1286
      %v1288 = vsel %vm326, %v1285, %v1287
      %v1289 = vsel %vm326, %v1287, %v1285
      %v1290 = vpack.c.bf16 %v1289, %v1289
      %v1291 = vpack.c.bf16 %v1288, %v1288
      %v1292 = vmul.bf16 %v1290, %v226
      %v1293 = vmul.bf16 %v1291, %v233
      %v1296 = vrot.slane %v1292, 4
      %v1297 = vrot.slane %v1293, 4
      %1300 = vst [vmem:[#allocation2] sm:$0xf0] %v1296
      %1301 = vst [vmem:[#allocation2 + $0x8] sm:$0xf0] %v1297
      %1302 = vrot.lane.b32.xlu0 %v1043, 15
      %v1303 = vpop.permute.xlu0 %1302
      %1304 = vrot.lane.b32.xlu0 %v1045, 15
      %v1305 = vpop.permute.xlu0 %1304
      %v1306 = vsel %vm345, %v1303, %v1305
      %v1307 = vsel %vm345, %v1305, %v1303
      %v1308 = vpack.c.bf16 %v1307, %v1307
      %v1309 = vpack.c.bf16 %v1306, %v1306
      %v1310 = vmul.bf16 %v1308, %v237
      %v1311 = vmul.bf16 %v1309, %v241
      %1312 = vst [vmem:[#allocation2 + $0x10] sm:$0xf] %v1310
      %1313 = vst [vmem:[#allocation2 + $0x18] sm:$0xf] %v1311
      %1314 = vrot.lane.b32.xlu0 %v1043, 1
      %v1315 = vpop.permute.xlu0 %1314
      %1316 = vrot.lane.b32.xlu0 %v1045, 1
      %v1317 = vpop.permute.xlu0 %1316
      %v1318 = vsel %vm364, %v1315, %v1317
      %v1319 = vsel %vm364, %v1317, %v1315
      %v1320 = vpack.c.bf16 %v1319, %v1319
      %v1321 = vpack.c.bf16 %v1318, %v1318
      %v1322 = vmul.bf16 %v1320, %v245
      %v1323 = vmul.bf16 %v1321, %v249
      %v1326 = vrot.slane %v1322, 4
      %v1327 = vrot.slane %v1323, 4
      %1330 = vst [vmem:[#allocation2 + $0x10] sm:$0xf0] %v1326
      %1331 = vst [vmem:[#allocation2 + $0x18] sm:$0xf0] %v1327
      %v1332 = vpack.c.bf16 %v1043, %v1043
      %v1333 = vpack.c.bf16 %v1045, %v1045
      %1334 = vst [vmem:[#allocation2 + $0x20] sm:$0xf] %v1332
      %1335 = vst [vmem:[#allocation2 + $0x28] sm:$0xf] %v1333
      %1336 = vrot.lane.b32.xlu0 %v1043, 127
      %v1337 = vpop.permute.xlu0 %1336
      %1338 = vrot.lane.b32.xlu0 %v1045, 127
      %v1339 = vpop.permute.xlu0 %1338
      %v1340 = vsel %vm387, %v1337, %v1339
      %v1341 = vsel %vm387, %v1339, %v1337
      %v1342 = vpack.c.bf16 %v1340, %v1340
      %v1343 = vpack.c.bf16 %v1341, %v1341
      %v1344 = vmul.bf16 %v1342, %v253
      %v1345 = vmul.bf16 %v1343, %v257
      %v1348 = vrot.slane %v1344, 4
      %v1349 = vrot.slane %v1345, 4
      %1352 = vst [vmem:[#allocation2 + $0x20] sm:$0xf0] %v1348
      %1353 = vst [vmem:[#allocation2 + $0x28] sm:$0xf0] %v1349
      %1354 = vrot.lane.b32.xlu0 %v1043, 113
      %v1355 = vpop.permute.xlu0 %1354
      %1356 = vrot.lane.b32.xlu0 %v1045, 113
      %v1357 = vpop.permute.xlu0 %1356
      %v1358 = vsel %vm406, %v1355, %v1357
      %v1359 = vsel %vm406, %v1357, %v1355
      %v1360 = vpack.c.bf16 %v1358, %v1358
      %v1361 = vpack.c.bf16 %v1359, %v1359
      %v1362 = vmul.bf16 %v1360, %v261
      %v1363 = vmul.bf16 %v1361, %v265
      %1364 = vst [vmem:[#allocation2 + $0x30] sm:$0xf] %v1362
      %1365 = vst [vmem:[#allocation2 + $0x38] sm:$0xf] %v1363
      %1366 = vrot.lane.b32.xlu0 %v1043, 112
      %v1367 = vpop.permute.xlu0 %1366
      %1368 = vrot.lane.b32.xlu0 %v1045, 112
      %v1369 = vpop.permute.xlu0 %1368
      %v1370 = vsel %vm425, %v1367, %v1369
      %v1371 = vsel %vm425, %v1369, %v1367
      %v1372 = vpack.c.bf16 %v1370, %v1370
      %v1373 = vpack.c.bf16 %v1371, %v1371
      %v1374 = vmul.bf16 %v1372, %v269
      %v1375 = vmul.bf16 %v1373, %v273
      %v1378 = vrot.slane %v1374, 4
      %v1379 = vrot.slane %v1375, 4
      %1382 = vst [vmem:[#allocation2 + $0x30] sm:$0xf0] %v1378
      %1383 = vst [vmem:[#allocation2 + $0x38] sm:$0xf0] %v1379
      %1384 = vrot.lane.b32.xlu0 %v1043, 111
      %v1385 = vpop.permute.xlu0 %1384
      %1386 = vrot.lane.b32.xlu0 %v1045, 111
      %v1387 = vpop.permute.xlu0 %1386
      %v1388 = vsel %vm444, %v1385, %v1387
      %v1389 = vsel %vm444, %v1387, %v1385
      %v1390 = vpack.c.bf16 %v1388, %v1388
      %v1391 = vpack.c.bf16 %v1389, %v1389
      %v1392 = vmul.bf16 %v1390, %v285
      %v1393 = vmul.bf16 %v1391, %v292
      %1394 = vst [vmem:[#allocation2 + $0x40] sm:$0xf] %v1392
      %1395 = vst [vmem:[#allocation2 + $0x48] sm:$0xf] %v1393
      %v1396 = vld [vmem:[%s2 + $0x40] sm:$0xf]
      %v1397 = vld [vmem:[#allocation2] sm:$0xff]
      %v1398 = vld [vmem:[#allocation2 + $0x8] sm:$0xff]
      %v1399 = vld [vmem:[#allocation2 + $0x10] sm:$0xff]
      %v1400 = vld [vmem:[#allocation2 + $0x18] sm:$0xff]
      %v1401 = vld [vmem:[#allocation2 + $0x20] sm:$0xff]
      %v1402 = vld [vmem:[#allocation2 + $0x28] sm:$0xff]
      %v1403 = vld [vmem:[#allocation2 + $0x30] sm:$0xff]
      %v1404 = vld [vmem:[#allocation2 + $0x38] sm:$0xff]
      %v1405 = vld [vmem:[#allocation2 + $0x40] sm:$0xf]
      %v1406 = vld [vmem:[#allocation2 + $0x48] sm:$0xf]
      %v1407 = vld [vmem:[%s3 + $0x30] sm:$0xff]
      %1409 = vset.pattern.permute.xlu0 0
      %1410 = vperm.xlu0 %1409, %v1407
      %v1411 = vpop.permute.xlu0 %1410
      %v1414 = vsel %vm993, %v1396, 0
      %v1417 = vsel %vm997, %v1405, 0
      %v1420 = vsel %vm997, %v1406, 0
      %1422 = vmatprep.subr.bf16.mxu0 %v1398
      %1423 = vmatpush1.bf16.msra.mxu0 %v1397
      %1424 = vmatprep.subr.bf16.mxu0 %v1400
      %1425 = vmatpush1.bf16.msra.mxu0 %v1399
      %1426 = vmatprep.subr.bf16.mxu0 %v1402
      %1427 = vmatpush1.bf16.msra.mxu0 %v1401
      %1428 = vmatprep.subr.bf16.mxu0 %v1404
      %1429 = vmatpush1.bf16.msra.mxu0 %v1403
      %1430 = vmatprep.subr.bf16.mxu0 %v1420
      %1431 = vmatpush1.bf16.msra.mxu0 %v1417
      %1432 = vmatprep.subr.bf16.mxu0 0
      %1433 = vmatpush1.bf16.msra.mxu0 0
      %1434 = vmatprep.subr.bf16.mxu0 0
      %1435 = vmatpush1.bf16.msra.mxu0 0
      %1436 = vmatprep.subr.bf16.mxu0 0
      %1437 = vmatpush1.bf16.msra.mxu0 0
      %1438 = vmatprep.subr.bf16.mxu0 0
      %1439 = vmatpush1.bf16.msra.mxu0 0
      %1440 = vmatprep.subr.bf16.mxu0 0
      %1441 = vmatpush1.bf16.msra.mxu0 0
      %1442 = vmatprep.subr.bf16.mxu0 0
      %1443 = vmatpush1.bf16.msra.mxu0 0
      %1444 = vmatprep.subr.bf16.mxu0 0
      %1445 = vmatpush1.bf16.msra.mxu0 0
      %1446 = vmatprep.subr.bf16.mxu0 0
      %1447 = vmatpush1.bf16.msra.mxu0 0
      %1448 = vmatprep.subr.bf16.mxu0 0
      %1449 = vmatpush1.bf16.msra.mxu0 0
      %1450 = vmatprep.subr.bf16.mxu0 0
      %1451 = vmatpush1.bf16.msra.mxu0 0
      %1452 = vmatprep.subr.bf16.mxu0 0
      %1453 = vmatpush1.bf16.msra.mxu0 0
      %1454 = vmatprep.mubr.bf16.mxu0 0
      %1455 = vmatmul.mubr.bf16.gmra.mrb[0].mxu0 %v1414
      %v1456 = vpop.f32.mrb[0].mxu0
      %v1457 = vadd.f32 %v1411, %v1456
      %v1458 = vpop.f32.mrb[0].mxu0
      %v1459 = vadd.f32 %v1411, %v1458
      %v1460 = vpop.f32.mrb[0].mxu0
      %v1461 = vpop.f32.mrb[0].mxu0
      %1462 = vdwg.mxu0
      %v1463 = vsub.f32 0.0, %v1457
      %v1464 = vsub.f32 0.0, %v1459
      %v1465 = vmul.f32 %v1463, 1.442695
      %v1466 = vpow.pop %v1465
      %v1467 = vmul.f32 %v1464, 1.442695
      %v1468 = vpow.pop %v1467
      %v1469 = vadd.f32 %v1466, 1.0
      %v1470 = vadd.f32 %v1468, 1.0
      %v1471 = vrcp.pop %v1469
      %v1472 = vrcp.pop %v1470
      %v1473 = vmul.f32 %v1457, %v1471
      %v1474 = vmul.f32 %v1459, %v1472
      %1475 = vrot.lane.b32.xlu0 %v1473, 17
      %v1476 = vpop.permute.xlu0 %1475
      %1477 = vrot.lane.b32.xlu0 %v1474, 17
      %v1478 = vpop.permute.xlu0 %1477
      %v1479 = vsel %vm307, %v1476, %v1478
      %v1480 = vsel %vm307, %v1478, %v1476
      %v1481 = vpack.c.bf16 %v1480, %v1480
      %v1482 = vpack.c.bf16 %v1479, %v1479
      %v1483 = vmul.bf16 %v1481, %v212
      %v1484 = vmul.bf16 %v1482, %v219
      %1485 = vst [vmem:[#allocation2] sm:$0xf] %v1483
      %1486 = vst [vmem:[#allocation2 + $0x8] sm:$0xf] %v1484
      %1487 = vrot.lane.b32.xlu0 %v1473, 16
      %v1488 = vpop.permute.xlu0 %1487
      %1489 = vrot.lane.b32.xlu0 %v1474, 16
      %v1490 = vpop.permute.xlu0 %1489
      %v1491 = vsel %vm326, %v1488, %v1490
      %v1492 = vsel %vm326, %v1490, %v1488
      %v1493 = vpack.c.bf16 %v1492, %v1492
      %v1494 = vpack.c.bf16 %v1491, %v1491
      %v1495 = vmul.bf16 %v1493, %v226
      %v1496 = vmul.bf16 %v1494, %v233
      %v1499 = vrot.slane %v1495, 4
      %v1500 = vrot.slane %v1496, 4
      %1503 = vst [vmem:[#allocation2] sm:$0xf0] %v1499
      %1504 = vst [vmem:[#allocation2 + $0x8] sm:$0xf0] %v1500
      %1505 = vrot.lane.b32.xlu0 %v1473, 15
      %v1506 = vpop.permute.xlu0 %1505
      %1507 = vrot.lane.b32.xlu0 %v1474, 15
      %v1508 = vpop.permute.xlu0 %1507
      %v1509 = vsel %vm345, %v1506, %v1508
      %v1510 = vsel %vm345, %v1508, %v1506
      %v1511 = vpack.c.bf16 %v1510, %v1510
      %v1512 = vpack.c.bf16 %v1509, %v1509
      %v1513 = vmul.bf16 %v1511, %v237
      %v1514 = vmul.bf16 %v1512, %v241
      %1515 = vst [vmem:[#allocation2 + $0x10] sm:$0xf] %v1513
      %1516 = vst [vmem:[#allocation2 + $0x18] sm:$0xf] %v1514
      %1517 = vrot.lane.b32.xlu0 %v1473, 1
      %v1518 = vpop.permute.xlu0 %1517
      %1519 = vrot.lane.b32.xlu0 %v1474, 1
      %v1520 = vpop.permute.xlu0 %1519
      %v1521 = vsel %vm364, %v1518, %v1520
      %v1522 = vsel %vm364, %v1520, %v1518
      %v1523 = vpack.c.bf16 %v1522, %v1522
      %v1524 = vpack.c.bf16 %v1521, %v1521
      %v1525 = vmul.bf16 %v1523, %v245
      %v1526 = vmul.bf16 %v1524, %v249
      %v1529 = vrot.slane %v1525, 4
      %v1530 = vrot.slane %v1526, 4
      %1533 = vst [vmem:[#allocation2 + $0x10] sm:$0xf0] %v1529
      %1534 = vst [vmem:[#allocation2 + $0x18] sm:$0xf0] %v1530
      %v1535 = vpack.c.bf16 %v1473, %v1473
      %v1536 = vpack.c.bf16 %v1474, %v1474
      %1537 = vst [vmem:[#allocation2 + $0x20] sm:$0xf] %v1535
      %1538 = vst [vmem:[#allocation2 + $0x28] sm:$0xf] %v1536
      %1539 = vrot.lane.b32.xlu0 %v1473, 127
      %v1540 = vpop.permute.xlu0 %1539
      %1541 = vrot.lane.b32.xlu0 %v1474, 127
      %v1542 = vpop.permute.xlu0 %1541
      %v1543 = vsel %vm387, %v1540, %v1542
      %v1544 = vsel %vm387, %v1542, %v1540
      %v1545 = vpack.c.bf16 %v1543, %v1543
      %v1546 = vpack.c.bf16 %v1544, %v1544
      %v1547 = vmul.bf16 %v1545, %v253
      %v1548 = vmul.bf16 %v1546, %v257
      %v1551 = vrot.slane %v1547, 4
      %v1552 = vrot.slane %v1548, 4
      %1555 = vst [vmem:[#allocation2 + $0x20] sm:$0xf0] %v1551
      %1556 = vst [vmem:[#allocation2 + $0x28] sm:$0xf0] %v1552
      %1557 = vrot.lane.b32.xlu0 %v1473, 113
      %v1558 = vpop.permute.xlu0 %1557
      %1559 = vrot.lane.b32.xlu0 %v1474, 113
      %v1560 = vpop.permute.xlu0 %1559
      %v1561 = vsel %vm406, %v1558, %v1560
      %v1562 = vsel %vm406, %v1560, %v1558
      %v1563 = vpack.c.bf16 %v1561, %v1561
      %v1564 = vpack.c.bf16 %v1562, %v1562
      %v1565 = vmul.bf16 %v1563, %v261
      %v1566 = vmul.bf16 %v1564, %v265
      %1567 = vst [vmem:[#allocation2 + $0x30] sm:$0xf] %v1565
      %1568 = vst [vmem:[#allocation2 + $0x38] sm:$0xf] %v1566
      %1569 = vrot.lane.b32.xlu0 %v1473, 112
      %v1570 = vpop.permute.xlu0 %1569
      %1571 = vrot.lane.b32.xlu0 %v1474, 112
      %v1572 = vpop.permute.xlu0 %1571
      %v1573 = vsel %vm425, %v1570, %v1572
      %v1574 = vsel %vm425, %v1572, %v1570
      %v1575 = vpack.c.bf16 %v1573, %v1573
      %v1576 = vpack.c.bf16 %v1574, %v1574
      %v1577 = vmul.bf16 %v1575, %v269
      %v1578 = vmul.bf16 %v1576, %v273
      %v1581 = vrot.slane %v1577, 4
      %v1582 = vrot.slane %v1578, 4
      %1585 = vst [vmem:[#allocation2 + $0x30] sm:$0xf0] %v1581
      %1586 = vst [vmem:[#allocation2 + $0x38] sm:$0xf0] %v1582
      %1587 = vrot.lane.b32.xlu0 %v1473, 111
      %v1588 = vpop.permute.xlu0 %1587
      %1589 = vrot.lane.b32.xlu0 %v1474, 111
      %v1590 = vpop.permute.xlu0 %1589
      %v1591 = vsel %vm444, %v1588, %v1590
      %v1592 = vsel %vm444, %v1590, %v1588
      %v1593 = vpack.c.bf16 %v1591, %v1591
      %v1594 = vpack.c.bf16 %v1592, %v1592
      %v1595 = vmul.bf16 %v1593, %v285
      %v1596 = vmul.bf16 %v1594, %v292
      %1597 = vst [vmem:[#allocation2 + $0x40] sm:$0xf] %v1595
      %1598 = vst [vmem:[#allocation2 + $0x48] sm:$0xf] %v1596
      %v1599 = vld [vmem:[%s2 + $0x48] sm:$0xf]
      %v1600 = vld [vmem:[#allocation2] sm:$0xff]
      %v1601 = vld [vmem:[#allocation2 + $0x8] sm:$0xff]
      %v1602 = vld [vmem:[#allocation2 + $0x10] sm:$0xff]
      %v1603 = vld [vmem:[#allocation2 + $0x18] sm:$0xff]
      %v1604 = vld [vmem:[#allocation2 + $0x20] sm:$0xff]
      %v1605 = vld [vmem:[#allocation2 + $0x28] sm:$0xff]
      %v1606 = vld [vmem:[#allocation2 + $0x30] sm:$0xff]
      %v1607 = vld [vmem:[#allocation2 + $0x38] sm:$0xff]
      %v1608 = vld [vmem:[#allocation2 + $0x40] sm:$0xf]
      %v1609 = vld [vmem:[#allocation2 + $0x48] sm:$0xf]
      %v1610 = vld [vmem:[%s3 + $0x38] sm:$0xff]
      %1612 = vset.pattern.permute.xlu0 0
      %1613 = vperm.xlu0 %1612, %v1610
      %v1614 = vpop.permute.xlu0 %1613
      %v1617 = vsel %vm993, %v1599, 0
      %v1620 = vsel %vm997, %v1608, 0
      %v1623 = vsel %vm997, %v1609, 0
      %1625 = vmatprep.subr.bf16.mxu0 %v1601
      %1626 = vmatpush1.bf16.msra.mxu0 %v1600
      %1627 = vmatprep.subr.bf16.mxu0 %v1603
      %1628 = vmatpush1.bf16.msra.mxu0 %v1602
      %1629 = vmatprep.subr.bf16.mxu0 %v1605
      %1630 = vmatpush1.bf16.msra.mxu0 %v1604
      %1631 = vmatprep.subr.bf16.mxu0 %v1607
      %1632 = vmatpush1.bf16.msra.mxu0 %v1606
      %1633 = vmatprep.subr.bf16.mxu0 %v1623
      %1634 = vmatpush1.bf16.msra.mxu0 %v1620
      %1635 = vmatprep.subr.bf16.mxu0 0
      %1636 = vmatpush1.bf16.msra.mxu0 0
      %1637 = vmatprep.subr.bf16.mxu0 0
      %1638 = vmatpush1.bf16.msra.mxu0 0
      %1639 = vmatprep.subr.bf16.mxu0 0
      %1640 = vmatpush1.bf16.msra.mxu0 0
      %1641 = vmatprep.subr.bf16.mxu0 0
      %1642 = vmatpush1.bf16.msra.mxu0 0
      %1643 = vmatprep.subr.bf16.mxu0 0
      %1644 = vmatpush1.bf16.msra.mxu0 0
      %1645 = vmatprep.subr.bf16.mxu0 0
      %1646 = vmatpush1.bf16.msra.mxu0 0
      %1647 = vmatprep.subr.bf16.mxu0 0
      %1648 = vmatpush1.bf16.msra.mxu0 0
      %1649 = vmatprep.subr.bf16.mxu0 0
      %1650 = vmatpush1.bf16.msra.mxu0 0
      %1651 = vmatprep.subr.bf16.mxu0 0
      %1652 = vmatpush1.bf16.msra.mxu0 0
      %1653 = vmatprep.subr.bf16.mxu0 0
      %1654 = vmatpush1.bf16.msra.mxu0 0
      %1655 = vmatprep.subr.bf16.mxu0 0
      %1656 = vmatpush1.bf16.msra.mxu0 0
      %1657 = vmatprep.mubr.bf16.mxu0 0
      %1658 = vmatmul.mubr.bf16.gmra.mrb[0].mxu0 %v1617
      %v1659 = vpop.f32.mrb[0].mxu0
      %v1660 = vadd.f32 %v1614, %v1659
      %v1661 = vpop.f32.mrb[0].mxu0
      %v1662 = vadd.f32 %v1614, %v1661
      %v1663 = vpop.f32.mrb[0].mxu0
      %v1664 = vpop.f32.mrb[0].mxu0
      %1665 = vdwg.mxu0
      %v1666 = vadd.f32 %v1660, %v1043
      %v1667 = vadd.f32 %v1662, %v1045
      %v1668 = vsub.f32 0.0, %v1666
      %v1669 = vsub.f32 0.0, %v1667
      %v1670 = vmul.f32 %v1668, 1.442695
      %v1671 = vpow.pop %v1670
      %v1672 = vmul.f32 %v1669, 1.442695
      %v1673 = vpow.pop %v1672
      %v1674 = vadd.f32 %v1671, 1.0
      %v1675 = vadd.f32 %v1673, 1.0
      %v1676 = vrcp.pop %v1674
      %v1677 = vrcp.pop %v1675
      %v1678 = vmul.f32 %v1666, %v1676
      %v1679 = vmul.f32 %v1667, %v1677
      %v1680 = vld [vmem:[%s2 + $0x60] sm:$0xf]
      %v1681 = vpack.c.bf16 %v1678, %v1678
      %v1682 = vpack.c.bf16 %v1679, %v1679
      %vm1683 = vcmask 64512
      %v1685 = vsel %vm1683, %v1680, 0
      %v1688 = vsel %vm997, %v1681, 0
      %v1691 = vsel %vm997, %v1682, 0
      %1693 = vmatprep.subr.bf16.mxu0 %v1691
      %1694 = vmatpush1.bf16.msra.mxu0 %v1688
      %1695 = vmatprep.subr.bf16.mxu0 0
      %1696 = vmatpush1.bf16.msra.mxu0 0
      %1697 = vmatprep.subr.bf16.mxu0 0
      %1698 = vmatpush1.bf16.msra.mxu0 0
      %1699 = vmatprep.subr.bf16.mxu0 0
      %1700 = vmatpush1.bf16.msra.mxu0 0
      %1701 = vmatprep.subr.bf16.mxu0 0
      %1702 = vmatpush1.bf16.msra.mxu0 0
      %1703 = vmatprep.subr.bf16.mxu0 0
      %1704 = vmatpush1.bf16.msra.mxu0 0
      %1705 = vmatprep.subr.bf16.mxu0 0
      %1706 = vmatpush1.bf16.msra.mxu0 0
      %1707 = vmatprep.subr.bf16.mxu0 0
      %1708 = vmatpush1.bf16.msra.mxu0 0
      %1709 = vmatprep.subr.bf16.mxu0 0
      %1710 = vmatpush1.bf16.msra.mxu0 0
      %1711 = vmatprep.subr.bf16.mxu0 0
      %1712 = vmatpush1.bf16.msra.mxu0 0
      %1713 = vmatprep.subr.bf16.mxu0 0
      %1714 = vmatpush1.bf16.msra.mxu0 0
      %1715 = vmatprep.subr.bf16.mxu0 0
      %1716 = vmatpush1.bf16.msra.mxu0 0
      %1717 = vmatprep.subr.bf16.mxu0 0
      %1718 = vmatpush1.bf16.msra.mxu0 0
      %1719 = vmatprep.subr.bf16.mxu0 0
      %1720 = vmatpush1.bf16.msra.mxu0 0
      %1721 = vmatprep.subr.bf16.mxu0 0
      %1722 = vmatpush1.bf16.msra.mxu0 0
      %1723 = vmatprep.subr.bf16.mxu0 0
      %1724 = vmatpush1.bf16.msra.mxu0 0
      %1725 = vmatprep.mubr.bf16.mxu0 0
      %1726 = vmatmul.mubr.bf16.gmra.mrb[0].mxu0 %v1685
      %v1727 = vpop.f32.mrb[0].mxu0
      %v1728 = vadd.f32 0.0, %v1727
      %v1729 = vpop.f32.mrb[0].mxu0
      %v1730 = vadd.f32 0.0, %v1729
      %v1731 = vpop.f32.mrb[0].mxu0
      %v1732 = vpop.f32.mrb[0].mxu0
      %1733 = vdwg.mxu0
      %v1734 = vadd.f32 %v1270, %v1728
      %v1735 = vadd.f32 %v1271, %v1730
      %v1736 = vld [vmem:[%s2 + $0x50] sm:$0xf]
      %v1737 = vld [vmem:[%s2 + $0x58] sm:$0xf]
      %v1738 = vpack.c.bf16 %v1734, %v1734
      %v1739 = vpack.c.bf16 %v1735, %v1735
      %v1742 = vunpack.c.l.b16 %v1736
      %v1743 = vunpack.c.l.b16 %v1737
      %v1744 = vpack.c.b16 %v1743, %v1742
      %v1746 = vsel %vm1683, %v1744, 0
      %v1749 = vsel %vm997, %v1738, 0
      %v1752 = vsel %vm997, %v1739, 0
      %1754 = vmatprep.subr.bf16.mxu0 %v1752
      %1755 = vmatpush1.bf16.msra.mxu0 %v1749
      %1756 = vmatprep.subr.bf16.mxu0 0
      %1757 = vmatpush1.bf16.msra.mxu0 0
      %1758 = vmatprep.subr.bf16.mxu0 0
      %1759 = vmatpush1.bf16.msra.mxu0 0
      %1760 = vmatprep.subr.bf16.mxu0 0
      %1761 = vmatpush1.bf16.msra.mxu0 0
      %1762 = vmatprep.subr.bf16.mxu0 0
      %1763 = vmatpush1.bf16.msra.mxu0 0
      %1764 = vmatprep.subr.bf16.mxu0 0
      %1765 = vmatpush1.bf16.msra.mxu0 0
      %1766 = vmatprep.subr.bf16.mxu0 0
      %1767 = vmatpush1.bf16.msra.mxu0 0
      %1768 = vmatprep.subr.bf16.mxu0 0
      %1769 = vmatpush1.bf16.msra.mxu0 0
      %1770 = vmatprep.subr.bf16.mxu0 0
      %1771 = vmatpush1.bf16.msra.mxu0 0
      %1772 = vmatprep.subr.bf16.mxu0 0
      %1773 = vmatpush1.bf16.msra.mxu0 0
      %1774 = vmatprep.subr.bf16.mxu0 0
      %1775 = vmatpush1.bf16.msra.mxu0 0
      %1776 = vmatprep.subr.bf16.mxu0 0
      %1777 = vmatpush1.bf16.msra.mxu0 0
      %1778 = vmatprep.subr.bf16.mxu0 0
      %1779 = vmatpush1.bf16.msra.mxu0 0
      %1780 = vmatprep.subr.bf16.mxu0 0
      %1781 = vmatpush1.bf16.msra.mxu0 0
      %1782 = vmatprep.subr.bf16.mxu0 0
      %1783 = vmatpush1.bf16.msra.mxu0 0
      %1784 = vmatprep.subr.bf16.mxu0 0
      %1785 = vmatpush1.bf16.msra.mxu0 0
      %1786 = vmatprep.mubr.bf16.mxu0 0
      %1787 = vmatmul.mubr.bf16.gmra.mrb[0].mxu0 %v1746
      %v1788 = vpop.f32.mrb[0].mxu0
      %v1789 = vadd.f32 0.0, %v1788
      %v1790 = vpop.f32.mrb[0].mxu0
      %v1791 = vadd.f32 0.0, %v1790
      %v1792 = vpop.f32.mrb[0].mxu0
      %v1793 = vadd.f32 0.0, %v1792
      %v1794 = vpop.f32.mrb[0].mxu0
      %v1795 = vadd.f32 0.0, %v1794
      %1796 = vdwg.mxu0
      %v1797 = vadd.f32 %v848, %v1789
      %v1798 = vadd.f32 %v849, %v1791
      %v1799 = vadd.f32 %v850, %v1793
      %v1800 = vadd.f32 %v851, %v1795
      %1801 = vst [vmem:[%s197] sm:$0xff] %v1797
      %1802 = vst [vmem:[%s197 + $0x8] sm:$0xff] %v1798
      %1803 = vst [vmem:[%s197 + $0x10] sm:$0xff] %v1799
      %1804 = vst [vmem:[%s197 + $0x18] sm:$0xff] %v1800
      %p1805 = scmp.lt.s32.totalorder %s15, 1
      %s1806 = scalar_select %p1805, %s15, 1
      %s1807 = smul.addr %s1806, 4
      %s1808 = smul.addr %s1807, 8
      %s1809 = scalar_lea.vmem %s4, %s1808
      // Predicated region
      $region37: #{fractal_block_forward.1} parent=35 // pred_check
        %p1810 = pneg %p122
      $region38: #{fractal_block_forward.1} parent=35 // pred_check_branch
        %1812 = sbr.rel (%p1810) target = $region40
      $region39: #{fractal_block_forward.1} parent=35 // pred_region
        _
      $region40: #{fractal_block_forward.1} parent=35 // pred_fallthru
        _
    $region36: #{fractal_block_forward.1} parent=5 // pred_fallthru
      _
    %p1813 = scmp.le.s32.totalorder 2, %s10
    // Predicated region
    $region41: #{fractal_block_forward.1} parent=5 // pred_check
      %p1814 = pneg %p1813
    $region42: #{fractal_block_forward.1} parent=5 // pred_check_branch
      %1816 = sbr.rel (%p1814) target = $region44
    $region43: #{fractal_block_forward.1} parent=5 // pred_region
      %s1817 = ssub.s32 %s10, 2
      // Predicated region
      $region45: #{fractal_block_forward.1} parent=43 // pred_check
        %p1818 = pneg %p128
      $region46: #{fractal_block_forward.1} parent=43 // pred_check_branch
        %1820 = sbr.rel (%p1818) target = $region48
      $region47: #{fractal_block_forward.1} parent=43 // pred_region
        %p1821 = scmp.lt.s32.totalorder %s16, 1
        %s1822 = scalar_select %p1821, %s16, 1
        %s1823 = smul.addr %s1822, 4
        %s1824 = smul.addr %s1823, 8
        %s1825 = scalar_lea.vmem %s4, %s1824
      $region48: #{fractal_block_forward.1} parent=43 // pred_fallthru
        _
    $region44: #{fractal_block_forward.1} parent=5 // pred_fallthru
      _
  $region6: #{fractal_block_forward.1} parent=0 // loop_footer
    %s14 = sadd.s32 1, %s10
  $region7: #{fractal_block_forward.1} parent=0 // loop_footer_branch
    %9 = sbr.rel target = $region3
  $region8: #{fractal_block_forward.1} parent=0 // loop_exit
    _

</llo_original>
